<compile_context>
chip_gen: v6e
topology: v6e:2x2x1
jax: 0.10.0
libtpu: 0.0.40
codegen_flags: <defaults>
</compile_context>

<pallas_src>
import math
import functools

import jax
import jax.numpy as jnp
from jax import lax
from jax.experimental import pallas as pl
from jax.experimental.pallas import tpu as pltpu


# ----------------------------- in-kernel helpers -----------------------------

def _layer_norm(x, gamma, beta, eps=1e-5):
    mu = jnp.mean(x, axis=-1, keepdims=True)
    var = jnp.mean(jnp.square(x - mu), axis=-1, keepdims=True)
    return (x - mu) * lax.rsqrt(var + eps) * gamma + beta


def _gelu_exact(x):
    # nn.GELU() default: exact erf-based GELU (kept for parity with PyTorch).
    return 0.5 * x * (1.0 + lax.erf(x / math.sqrt(2.0)))


# --------------------------- tuning / spec helpers ----------------------------

@functools.lru_cache(maxsize=None)
def _vmem_limit():
    """Per-generation VMEM limit with headroom (v7x: ~54 MiB, v5e/v6e: ~109 MiB)."""
    try:
        info = pltpu.get_tpu_info()
        cap = getattr(info, "vmem_capacity_bytes", None) or \
            getattr(info, "vmem_size_bytes", None)
        if cap:
            return int(min(cap * 0.85, 112 * 1024 * 1024))
    except Exception:
        pass
    return 64 * 1024 * 1024


def _pick_hidden_chunk(hidden):
    """Largest divisor of 4*D that is <= 1024 and lane-aligned (or the full dim)."""
    if hidden <= 1024:
        return hidden
    for hc in range(1024, 0, -128):
        if hidden % hc == 0:
            return hc
    return hidden


def _pick_tile_v(d_model, vocab):
    """Vocab tile: keep a double-buffered (D, tv) bf16 tile around <= ~8 MiB."""
    cap = (4 * 1024 * 1024) // max(2 * d_model, 1)
    cap = max(256, (cap // 256) * 256)
    tv = min(vocab, 4096, cap)
    if tv < vocab:
        tv = max(256, (tv // 256) * 256)
    return tv


# Constant-index weight blocks are single-buffered (pl.Buffered(1)): the default
# double buffer doubles resident weight VMEM for zero overlap benefit.  Only a
# LoweringException triggers the (double-buffered) fallback.
_SINGLE_BUFFER_OK = [True]


def _const_spec(shape, single_buffer):
    index_map = lambda *_: (0,) * len(shape)
    if single_buffer:
        return pl.BlockSpec(shape, index_map, pipeline_mode=pl.Buffered(1))
    return pl.BlockSpec(shape, index_map)


def _call_with_const_spec_fallback(builder):
    if _SINGLE_BUFFER_OK[0]:
        try:
            return builder(True)
        except pltpu.LoweringException:
            _SINGLE_BUFFER_OK[0] = False
    return builder(False)


# --------------------------- decoder block kernel ----------------------------

def decoder_block_kernel(x_ref, ln1g_ref, ln1b_ref, wqkv_ref, wo_ref,
                         ln2g_ref, ln2b_ref, wfc_ref, wproj_ref,
                         o_ref, xn2_ref, *, num_heads):
    f = pl.program_id(1)                     # FFN hidden-chunk index ("arbitrary")
    _, T, D = x_ref.shape
    hd = D // num_heads
    scale = 1.0 / math.sqrt(hd)

    # ---- attention + residual + LN2: once per batch row (f == 0) ----
    @pl.when(f == 0)
    def _attention():
        x = x_ref[0]                                                  # (T, D) f32
        xn = _layer_norm(x, ln1g_ref[...], ln1b_ref[...])
        # Fused full-width QKV projection: (T, D) @ (D, 3D), bf16 in / f32 acc.
        qkv = jnp.dot(xn.astype(jnp.bfloat16), wqkv_ref[...],
                      preferred_element_type=jnp.float32).astype(jnp.bfloat16)

        # In-kernel causal additive bias (two VPU compares, no HBM traffic).
        row = lax.broadcasted_iota(jnp.int32, (T, T), 0)
        col = lax.broadcasted_iota(jnp.int32, (T, T), 1)
        bias = jnp.where(col <= row, 0.0, -1e30).astype(jnp.float32)

        # One head at a time: only a single (T, T) f32 score tile is live.
        ctx_heads = []
        for h in range(num_heads):
            qh = qkv[:, h * hd:(h + 1) * hd]                          # (T, hd)
            kh = qkv[:, D + h * hd:D + (h + 1) * hd]
            vh = qkv[:, 2 * D + h * hd:2 * D + (h + 1) * hd]
            s = jnp.einsum('td,sd->ts', qh, kh,
                           preferred_element_type=jnp.float32) * scale + bias
            s = s - jnp.max(s, axis=-1, keepdims=True)
            p = jnp.exp(s)
            p = p * pl.reciprocal(jnp.sum(p, axis=-1, keepdims=True), approx=True)
            ctx_heads.append(jnp.dot(p.astype(jnp.bfloat16), vh,
                                     preferred_element_type=jnp.float32
                                     ).astype(jnp.bfloat16))
        ctx = jnp.concatenate(ctx_heads, axis=-1)                     # (T, D) bf16
        # Fused full-width output projection: (T, D) @ (D, D).
        attn_out = jnp.dot(ctx, wo_ref[...], preferred_element_type=jnp.float32)

        h1 = x + attn_out                                             # residual, f32
        o_ref[...] = h1[None].astype(o_ref.dtype)                     # resident acc
        xn2_ref[...] = _layer_norm(h1, ln2g_ref[...],
                                   ln2b_ref[...]).astype(jnp.bfloat16)

    # ---- streamed FFN: one (D, Hc)/(Hc, D) weight slice per grid step ----
    hid = _gelu_exact(jnp.dot(xn2_ref[...], wfc_ref[...],
                              preferred_element_type=jnp.float32))    # (T, Hc)
    ff = jnp.dot(hid.astype(jnp.bfloat16), wproj_ref[...],
                 preferred_element_type=jnp.float32)                  # (T, D)
    o_ref[...] = o_ref[...] + ff[None].astype(o_ref.dtype)


def decoder_block(x, blk, num_heads, hidden_chunk):
    B, T, D = x.shape
    hidden = 4 * D
    nf = hidden // hidden_chunk
    (ln1g, ln1b, wqkv, wo, ln2g, ln2b, wfc, wproj) = blk
    kern = functools.partial(decoder_block_kernel, num_heads=num_heads)

    def builder(single_buffer):
        cs = functools.partial(_const_spec, single_buffer=single_buffer)
        return pl.pallas_call(
            kern,
            out_shape=jax.ShapeDtypeStruct((B, T, D), x.dtype),
            grid_spec=pltpu.PrefetchScalarGridSpec(
                num_scalar_prefetch=0,
                grid=(B, nf),                                   # b parallel, f arbitrary (last)
                in_specs=[
                    pl.BlockSpec((1, T, D), lambda b, f: (b, 0, 0)),   # x row
                    cs((1, D)), cs((1, D)),                            # ln_1 gamma/beta
                    cs((D, 3 * D)),                                    # fused W_qkv
                    cs((D, D)),                                        # W_out
                    cs((1, D)), cs((1, D)),                            # ln_2 gamma/beta
                    pl.BlockSpec((D, hidden_chunk), lambda b, f: (0, f)),   # W_fc slice
                    pl.BlockSpec((hidden_chunk, D), lambda b, f: (f, 0)),   # W_proj slice
                ],
                out_specs=pl.BlockSpec((1, T, D), lambda b, f: (b, 0, 0)),
                scratch_shapes=[pltpu.VMEM((T, D), jnp.bfloat16)],     # LN2 output
            ),
            compiler_params=pltpu.CompilerParams(
                dimension_semantics=("parallel", "arbitrary"),
                vmem_limit_bytes=_vmem_limit()),
        )(x, ln1g, ln1b, wqkv, wo, ln2g, ln2b, wfc, wproj)

    return _call_with_const_spec_fallback(builder)


# ------------------------- final layernorm + LM head -------------------------

def lnf_kernel(x_ref, g_ref, b_ref, o_ref):
    o_ref[...] = _layer_norm(x_ref[...], g_ref[...], b_ref[...]).astype(o_ref.dtype)


def lnf(x_last, g, b):
    B, D = x_last.shape
    return pl.pallas_call(
        lnf_kernel,
        out_shape=jax.ShapeDtypeStruct((B, D), jnp.float32),
        grid_spec=pltpu.PrefetchScalarGridSpec(
            num_scalar_prefetch=0, grid=(1,),
            in_specs=[pl.BlockSpec((B, D), lambda i: (0, 0)),
                      pl.BlockSpec((1, D), lambda i: (0, 0)),
                      pl.BlockSpec((1, D), lambda i: (0, 0))],
            out_specs=pl.BlockSpec((B, D), lambda i: (0, 0))),
        compiler_params=pltpu.CompilerParams(
            dimension_semantics=("arbitrary",),
            vmem_limit_bytes=_vmem_limit()),
    )(x_last, g, b)


def head_kernel(xn_ref, wh_ref, o_ref):
    o_ref[...] = jnp.dot(xn_ref[...].astype(jnp.bfloat16), wh_ref[...],
                         preferred_element_type=jnp.float32).astype(o_ref.dtype)


def lm_head(xn, wh):
    B, D = xn.shape
    V = wh.shape[1]
    tv = _pick_tile_v(D, V)

    def builder(single_buffer):
        cs = functools.partial(_const_spec, single_buffer=single_buffer)
        return pl.pallas_call(
            head_kernel,
            out_shape=jax.ShapeDtypeStruct((B, V), jnp.float32),
            grid_spec=pltpu.PrefetchScalarGridSpec(
                num_scalar_prefetch=0, grid=(pl.cdiv(V, tv),),
                in_specs=[cs((B, D)),                                  # pre-normalized
                          pl.BlockSpec((D, tv), lambda j: (0, j))],    # weight tile
                out_specs=pl.BlockSpec((B, tv), lambda j: (0, j))),
            compiler_params=pltpu.CompilerParams(
                dimension_semantics=("parallel",),
                vmem_limit_bytes=_vmem_limit()),
        )(xn, wh)

    return _call_with_const_spec_fallback(builder)


# ----------------------------- parameters / glue ------------------------------

def init_params(key, d_model, num_heads, max_length, vocab_size, layers):
    def nrm(k, shape, dtype=jnp.bfloat16, scale=0.02):
        return (scale * jax.random.normal(k, shape, dtype=jnp.float32)).astype(dtype)

    keys = jax.random.split(key, 3 + 4 * layers)
    params = {
        "num_heads": num_heads,
        "wte": nrm(keys[0], (vocab_size, d_model), jnp.float32),
        "wpe": nrm(keys[1], (max_length, d_model), jnp.float32),
        "blocks": [],
        "lnf_g": jnp.ones((1, d_model), jnp.float32),
        "lnf_b": jnp.zeros((1, d_model), jnp.float32),
        "w_head": nrm(keys[2], (d_model, vocab_size)),       # (in, out), bias=False
    }
    for l in range(layers):
        k0, k1, k2, k3 = keys[3 + 4 * l: 3 + 4 * (l + 1)]
        blk = (
            jnp.ones((1, d_model), jnp.float32),             # ln_1 gamma
            jnp.zeros((1, d_model), jnp.float32),            # ln_1 beta
            nrm(k0, (d_model, 3 * d_model)),                 # fused in_proj (Wq|Wk|Wv)^T
            nrm(k1, (d_model, d_model)),                     # out_proj^T
            jnp.ones((1, d_model), jnp.float32),             # ln_2 gamma
            jnp.zeros((1, d_model), jnp.float32),            # ln_2 beta
            nrm(k2, (d_model, 4 * d_model)),                 # c_fc^T
            nrm(k3, (4 * d_model, d_model)),                 # c_proj^T
        )
        params["blocks"].append(blk)
    return params


def transformer_forward(params, idx):
    """idx: (B, T) int32 token ids. Returns (logits (B, 1, vocab), None)."""
    B, T = idx.shape
    D = params["wte"].shape[1]
    tok_emb = jnp.take(params["wte"], idx, axis=0)           # gather glue (JAX)
    pos_emb = params["wpe"][:T]
    x = (tok_emb + pos_emb[None, :, :]).astype(jnp.float32)  # drop() = identity (eval)

    hc = _pick_hidden_chunk(4 * D)
    for blk in params["blocks"]:
        x = decoder_block(x, blk, params["num_heads"], hc)

    x_last = x[:, -1, :]                                     # ln_f is per-token
    xn = lnf(x_last, params["lnf_g"], params["lnf_b"])
    logits = lm_head(xn, params["w_head"])
    return logits[:, None, :], None                          # matches head(x[:, [-1], :])


# ------------------------------ pure-JAX reference ----------------------------

def _reference_forward(params, idx):
    B, T = idx.shape
    H = params["num_heads"]
    D = params["wte"].shape[1]
    hd = D // H
    x = (jnp.take(params["wte"], idx, axis=0) + params["wpe"][:T][None]).astype(jnp.float32)
    causal = jnp.tril(jnp.ones((T, T), bool))
    for (ln1g, ln1b, wqkv, wo, ln2g, ln2b, wfc, wproj) in params["blocks"]:
        xn = _layer_norm(x, ln1g[None], ln1b[None])
        qkv = xn @ wqkv.astype(jnp.float32)
        q, k, v = jnp.split(qkv, 3, axis=-1)
        q = q.reshape(B, T, H, hd).transpose(0, 2, 1, 3)
        k = k.reshape(B, T, H, hd).transpose(0, 2, 1, 3)
        v = v.reshape(B, T, H, hd).transpose(0, 2, 1, 3)
        s = jnp.einsum('bhqd,bhkd->bhqk', q, k) / math.sqrt(hd)
        s = jnp.where(causal[None, None], s, -jnp.inf)
        p = jax.nn.softmax(s, axis=-1)
        ctx = jnp.einsum('bhqk,bhkd->bhqd', p, v).transpose(0, 2, 1, 3).reshape(B, T, D)
        x = x + ctx @ wo.astype(jnp.float32)
        xn2 = _layer_norm(x, ln2g[None], ln2b[None])
        hid = _gelu_exact(xn2 @ wfc.astype(jnp.float32))
        x = x + hid @ wproj.astype(jnp.float32)
    xn = _layer_norm(x[:, -1:, :], params["lnf_g"][None], params["lnf_b"][None])
    return xn @ params["w_head"].astype(jnp.float32)


# ----------------------------------- main -------------------------------------

if __name__ == "__main__":
    d_model, num_heads, max_length, vocab_size, layers = 32, 4, 16, 64, 2
    B, T = 2, 8

    key = jax.random.PRNGKey(0)
    kp, ki = jax.random.split(key)
    params = init_params(kp, d_model, num_heads, max_length, vocab_size, layers)
    idx = jax.random.randint(ki, (B, T), 0, vocab_size, dtype=jnp.int32)

    logits, loss = transformer_forward(params, idx)
    logits = jax.block_until_ready(logits)

    assert logits.shape == (B, 1, vocab_size), logits.shape
    assert loss is None
    assert bool(jnp.all(jnp.isfinite(logits)))

    ref = _reference_forward(params, idx)
    assert bool(jnp.allclose(logits, ref, atol=2e-2, rtol=2e-2)), \
        float(jnp.max(jnp.abs(logits - ref)))

    print("KERNEL_OK")
</pallas_src>

<mosaic_0001>
module attributes {stable_mosaic.version = 11 : i64} {
  func.func @decoder_block_kernel(%arg0: i32, %arg1: i32, %arg2: memref<1x8x32xf32, #tpu.memory_space<vmem>>, %arg3: memref<1x32xf32, #tpu.memory_space<vmem>>, %arg4: memref<1x32xf32, #tpu.memory_space<vmem>>, %arg5: memref<32x96xbf16, #tpu.memory_space<vmem>>, %arg6: memref<32x32xbf16, #tpu.memory_space<vmem>>, %arg7: memref<1x32xf32, #tpu.memory_space<vmem>>, %arg8: memref<1x32xf32, #tpu.memory_space<vmem>>, %arg9: memref<32x128xbf16, #tpu.memory_space<vmem>>, %arg10: memref<128x32xbf16, #tpu.memory_space<vmem>>, %arg11: memref<1x8x32xf32, #tpu.memory_space<vmem>>, %arg12: memref<8x32xbf16, #tpu.memory_space<vmem>>) attributes {dimension_semantics = [#tpu.dimension_semantics<parallel>, #tpu.dimension_semantics<arbitrary>], iteration_bounds = array<i64: 2, 1>, scalar_prefetch = 0 : i64, scratch_operands = 1 : i64, tpu.core_type = #tpu.core_type<tc>, window_params = [{transform_indices = @transform_0, window_bounds = array<i64: 1, 8, 32>}, {pipeline_mode = #tpu.pipeline_mode<synchronous>, transform_indices = @transform_1, window_bounds = array<i64: 1, 32>}, {pipeline_mode = #tpu.pipeline_mode<synchronous>, transform_indices = @transform_2, window_bounds = array<i64: 1, 32>}, {pipeline_mode = #tpu.pipeline_mode<synchronous>, transform_indices = @transform_3, window_bounds = array<i64: 32, 96>}, {pipeline_mode = #tpu.pipeline_mode<synchronous>, transform_indices = @transform_4, window_bounds = array<i64: 32, 32>}, {pipeline_mode = #tpu.pipeline_mode<synchronous>, transform_indices = @transform_5, window_bounds = array<i64: 1, 32>}, {pipeline_mode = #tpu.pipeline_mode<synchronous>, transform_indices = @transform_6, window_bounds = array<i64: 1, 32>}, {transform_indices = @transform_7, window_bounds = array<i64: 32, 128>}, {transform_indices = @transform_8, window_bounds = array<i64: 128, 32>}, {transform_indices = @transform_9, window_bounds = array<i64: 1, 8, 32>}]} {
    %c0_i32 = arith.constant 0 : i32
    %0 = arith.cmpi eq, %arg1, %c0_i32 : i32
    %1 = arith.extui %0 : i1 to i32
    %c0_i32_0 = arith.constant 0 : i32
    %2 = arith.cmpi ne, %1, %c0_i32_0 : i32
    scf.if %2 {
      %c0_16 = arith.constant 0 : index
      %c0_17 = arith.constant 0 : index
      %c0_18 = arith.constant 0 : index
      %21 = vector.load %arg2[%c0_16, %c0_17, %c0_18] : memref<1x8x32xf32, #tpu.memory_space<vmem>>, vector<1x8x32xf32>
      %22 = vector.shape_cast %21 : vector<1x8x32xf32> to vector<8x32xf32>
      %c0_19 = arith.constant 0 : index
      %c0_20 = arith.constant 0 : index
      %23 = vector.load %arg3[%c0_19, %c0_20] : memref<1x32xf32, #tpu.memory_space<vmem>>, vector<1x32xf32>
      %c0_21 = arith.constant 0 : index
      %c0_22 = arith.constant 0 : index
      %24 = vector.load %arg4[%c0_21, %c0_22] : memref<1x32xf32, #tpu.memory_space<vmem>>, vector<1x32xf32>
      %cst_23 = arith.constant dense<0.000000e+00> : vector<8xf32>
      %25 = vector.multi_reduction <add>, %22, %cst_23 [1] : vector<8x32xf32> to vector<8xf32>
      %26 = vector.shape_cast %25 : vector<8xf32> to vector<8x1xf32>
      %cst_24 = arith.constant 3.200000e+01 : f32
      %27 = vector.broadcast %cst_24 : f32 to vector<8x1xf32>
      %28 = arith.divf %26, %27 : vector<8x1xf32>
      %29 = vector.broadcast %28 : vector<8x1xf32> to vector<8x32xf32>
      %30 = arith.subf %22, %29 : vector<8x32xf32>
      %31 = arith.mulf %30, %30 : vector<8x32xf32>
      %cst_25 = arith.constant dense<0.000000e+00> : vector<8xf32>
      %32 = vector.multi_reduction <add>, %31, %cst_25 [1] : vector<8x32xf32> to vector<8xf32>
      %33 = vector.shape_cast %32 : vector<8xf32> to vector<8x1xf32>
      %cst_26 = arith.constant 3.200000e+01 : f32
      %34 = vector.broadcast %cst_26 : f32 to vector<8x1xf32>
      %35 = arith.divf %33, %34 : vector<8x1xf32>
      %36 = vector.broadcast %28 : vector<8x1xf32> to vector<8x32xf32>
      %37 = arith.subf %22, %36 : vector<8x32xf32>
      %cst_27 = arith.constant 9.99999974E-6 : f32
      %38 = vector.broadcast %cst_27 : f32 to vector<8x1xf32>
      %39 = arith.addf %35, %38 : vector<8x1xf32>
      %40 = math.rsqrt %39 : vector<8x1xf32>
      %41 = vector.broadcast %40 : vector<8x1xf32> to vector<8x32xf32>
      %42 = arith.mulf %37, %41 : vector<8x32xf32>
      %43 = vector.broadcast %23 : vector<1x32xf32> to vector<8x32xf32>
      %44 = arith.mulf %42, %43 : vector<8x32xf32>
      %45 = vector.broadcast %24 : vector<1x32xf32> to vector<8x32xf32>
      %46 = arith.addf %44, %45 : vector<8x32xf32>
      %47 = arith.truncf %46 : vector<8x32xf32> to vector<8x32xbf16>
      %c0_28 = arith.constant 0 : index
      %c0_29 = arith.constant 0 : index
      %48 = vector.load %arg5[%c0_28, %c0_29] : memref<32x96xbf16, #tpu.memory_space<vmem>>, vector<32x96xbf16>
      %cst_30 = arith.constant dense<0.000000e+00> : vector<8x96xf32>
      %49 = tpu.matmul %47, %48, %cst_30 {dimension_numbers = #tpu.dot_dimension_numbers<[1], [0], [0], [1], [0, 0, 1, 1], [], []>} : vector<8x32xbf16>, vector<32x96xbf16>, vector<8x96xf32> -> vector<8x96xf32>
      %50 = arith.truncf %49 : vector<8x96xf32> to vector<8x96xbf16>
      %51 = tpu.iota {dimensions = array<i32: 0>} : vector<8x8xi32>
      %52 = tpu.iota {dimensions = array<i32: 1>} : vector<8x8xi32>
      %53 = arith.cmpi sle, %52, %51 : vector<8x8xi32>
      %cst_31 = arith.constant 0.000000e+00 : f32
      %cst_32 = arith.constant -1.000000e+30 : f32
      %54 = vector.broadcast %cst_31 : f32 to vector<8x8xf32>
      %55 = vector.broadcast %cst_32 : f32 to vector<8x8xf32>
      %56 = arith.select %53, %54, %55 : vector<8x8xi1>, vector<8x8xf32>
      %57 = vector.extract_strided_slice %50 {offsets = [0, 0], sizes = [8, 8], strides = [1, 1]} : vector<8x96xbf16> to vector<8x8xbf16>
      %58 = vector.extract_strided_slice %50 {offsets = [0, 32], sizes = [8, 8], strides = [1, 1]} : vector<8x96xbf16> to vector<8x8xbf16>
      %59 = vector.extract_strided_slice %50 {offsets = [0, 64], sizes = [8, 8], strides = [1, 1]} : vector<8x96xbf16> to vector<8x8xbf16>
      "tpu.trace_start"() <{level = 10 : i32, message = "td,sd->ts"}> : () -> ()
      %cst_33 = arith.constant dense<0.000000e+00> : vector<8x8xf32>
      %60 = tpu.matmul %57, %58, %cst_33 {dimension_numbers = #tpu.dot_dimension_numbers<[1], [1], [0], [0], [0, 0, 1, 0], [], []>} : vector<8x8xbf16>, vector<8x8xbf16>, vector<8x8xf32> -> vector<8x8xf32>
      "tpu.trace_stop"() : () -> ()
      %cst_34 = arith.constant 0.353553385 : f32
      %61 = vector.broadcast %cst_34 : f32 to vector<8x8xf32>
      %62 = arith.mulf %60, %61 : vector<8x8xf32>
      %63 = arith.addf %62, %56 : vector<8x8xf32>
      %cst_35 = arith.constant dense<0xFF800000> : vector<8xf32>
      %64 = vector.multi_reduction <maximumf>, %63, %cst_35 [1] : vector<8x8xf32> to vector<8xf32>
      %65 = vector.shape_cast %64 : vector<8xf32> to vector<8x1xf32>
      %66 = vector.broadcast %65 : vector<8x1xf32> to vector<8x8xf32>
      %67 = arith.subf %63, %66 : vector<8x8xf32>
      %68 = math.exp %67 : vector<8x8xf32>
      %cst_36 = arith.constant dense<0.000000e+00> : vector<8xf32>
      %69 = vector.multi_reduction <add>, %68, %cst_36 [1] : vector<8x8xf32> to vector<8xf32>
      %70 = vector.shape_cast %69 : vector<8xf32> to vector<8x1xf32>
      %71 = tpu.reciprocal %70 {approx = true} : vector<8x1xf32> -> vector<8x1xf32>
      %72 = vector.broadcast %71 : vector<8x1xf32> to vector<8x8xf32>
      %73 = arith.mulf %68, %72 : vector<8x8xf32>
      %74 = arith.truncf %73 : vector<8x8xf32> to vector<8x8xbf16>
      %cst_37 = arith.constant dense<0.000000e+00> : vector<8x8xf32>
      %75 = tpu.matmul %74, %59, %cst_37 {dimension_numbers = #tpu.dot_dimension_numbers<[1], [0], [0], [1], [0, 0, 1, 1], [], []>} : vector<8x8xbf16>, vector<8x8xbf16>, vector<8x8xf32> -> vector<8x8xf32>
      %76 = arith.truncf %75 : vector<8x8xf32> to vector<8x8xbf16>
      %77 = vector.extract_strided_slice %50 {offsets = [0, 8], sizes = [8, 8], strides = [1, 1]} : vector<8x96xbf16> to vector<8x8xbf16>
      %78 = vector.extract_strided_slice %50 {offsets = [0, 40], sizes = [8, 8], strides = [1, 1]} : vector<8x96xbf16> to vector<8x8xbf16>
      %79 = vector.extract_strided_slice %50 {offsets = [0, 72], sizes = [8, 8], strides = [1, 1]} : vector<8x96xbf16> to vector<8x8xbf16>
      "tpu.trace_start"() <{level = 10 : i32, message = "td,sd->ts"}> : () -> ()
      %cst_38 = arith.constant dense<0.000000e+00> : vector<8x8xf32>
      %80 = tpu.matmul %77, %78, %cst_38 {dimension_numbers = #tpu.dot_dimension_numbers<[1], [1], [0], [0], [0, 0, 1, 0], [], []>} : vector<8x8xbf16>, vector<8x8xbf16>, vector<8x8xf32> -> vector<8x8xf32>
      "tpu.trace_stop"() : () -> ()
      %cst_39 = arith.constant 0.353553385 : f32
      %81 = vector.broadcast %cst_39 : f32 to vector<8x8xf32>
      %82 = arith.mulf %80, %81 : vector<8x8xf32>
      %83 = arith.addf %82, %56 : vector<8x8xf32>
      %cst_40 = arith.constant dense<0xFF800000> : vector<8xf32>
      %84 = vector.multi_reduction <maximumf>, %83, %cst_40 [1] : vector<8x8xf32> to vector<8xf32>
      %85 = vector.shape_cast %84 : vector<8xf32> to vector<8x1xf32>
      %86 = vector.broadcast %85 : vector<8x1xf32> to vector<8x8xf32>
      %87 = arith.subf %83, %86 : vector<8x8xf32>
      %88 = math.exp %87 : vector<8x8xf32>
      %cst_41 = arith.constant dense<0.000000e+00> : vector<8xf32>
      %89 = vector.multi_reduction <add>, %88, %cst_41 [1] : vector<8x8xf32> to vector<8xf32>
      %90 = vector.shape_cast %89 : vector<8xf32> to vector<8x1xf32>
      %91 = tpu.reciprocal %90 {approx = true} : vector<8x1xf32> -> vector<8x1xf32>
      %92 = vector.broadcast %91 : vector<8x1xf32> to vector<8x8xf32>
      %93 = arith.mulf %88, %92 : vector<8x8xf32>
      %94 = arith.truncf %93 : vector<8x8xf32> to vector<8x8xbf16>
      %cst_42 = arith.constant dense<0.000000e+00> : vector<8x8xf32>
      %95 = tpu.matmul %94, %79, %cst_42 {dimension_numbers = #tpu.dot_dimension_numbers<[1], [0], [0], [1], [0, 0, 1, 1], [], []>} : vector<8x8xbf16>, vector<8x8xbf16>, vector<8x8xf32> -> vector<8x8xf32>
      %96 = arith.truncf %95 : vector<8x8xf32> to vector<8x8xbf16>
      %97 = vector.extract_strided_slice %50 {offsets = [0, 16], sizes = [8, 8], strides = [1, 1]} : vector<8x96xbf16> to vector<8x8xbf16>
      %98 = vector.extract_strided_slice %50 {offsets = [0, 48], sizes = [8, 8], strides = [1, 1]} : vector<8x96xbf16> to vector<8x8xbf16>
      %99 = vector.extract_strided_slice %50 {offsets = [0, 80], sizes = [8, 8], strides = [1, 1]} : vector<8x96xbf16> to vector<8x8xbf16>
      "tpu.trace_start"() <{level = 10 : i32, message = "td,sd->ts"}> : () -> ()
      %cst_43 = arith.constant dense<0.000000e+00> : vector<8x8xf32>
      %100 = tpu.matmul %97, %98, %cst_43 {dimension_numbers = #tpu.dot_dimension_numbers<[1], [1], [0], [0], [0, 0, 1, 0], [], []>} : vector<8x8xbf16>, vector<8x8xbf16>, vector<8x8xf32> -> vector<8x8xf32>
      "tpu.trace_stop"() : () -> ()
      %cst_44 = arith.constant 0.353553385 : f32
      %101 = vector.broadcast %cst_44 : f32 to vector<8x8xf32>
      %102 = arith.mulf %100, %101 : vector<8x8xf32>
      %103 = arith.addf %102, %56 : vector<8x8xf32>
      %cst_45 = arith.constant dense<0xFF800000> : vector<8xf32>
      %104 = vector.multi_reduction <maximumf>, %103, %cst_45 [1] : vector<8x8xf32> to vector<8xf32>
      %105 = vector.shape_cast %104 : vector<8xf32> to vector<8x1xf32>
      %106 = vector.broadcast %105 : vector<8x1xf32> to vector<8x8xf32>
      %107 = arith.subf %103, %106 : vector<8x8xf32>
      %108 = math.exp %107 : vector<8x8xf32>
      %cst_46 = arith.constant dense<0.000000e+00> : vector<8xf32>
      %109 = vector.multi_reduction <add>, %108, %cst_46 [1] : vector<8x8xf32> to vector<8xf32>
      %110 = vector.shape_cast %109 : vector<8xf32> to vector<8x1xf32>
      %111 = tpu.reciprocal %110 {approx = true} : vector<8x1xf32> -> vector<8x1xf32>
      %112 = vector.broadcast %111 : vector<8x1xf32> to vector<8x8xf32>
      %113 = arith.mulf %108, %112 : vector<8x8xf32>
      %114 = arith.truncf %113 : vector<8x8xf32> to vector<8x8xbf16>
      %cst_47 = arith.constant dense<0.000000e+00> : vector<8x8xf32>
      %115 = tpu.matmul %114, %99, %cst_47 {dimension_numbers = #tpu.dot_dimension_numbers<[1], [0], [0], [1], [0, 0, 1, 1], [], []>} : vector<8x8xbf16>, vector<8x8xbf16>, vector<8x8xf32> -> vector<8x8xf32>
      %116 = arith.truncf %115 : vector<8x8xf32> to vector<8x8xbf16>
      %117 = vector.extract_strided_slice %50 {offsets = [0, 24], sizes = [8, 8], strides = [1, 1]} : vector<8x96xbf16> to vector<8x8xbf16>
      %118 = vector.extract_strided_slice %50 {offsets = [0, 56], sizes = [8, 8], strides = [1, 1]} : vector<8x96xbf16> to vector<8x8xbf16>
      %119 = vector.extract_strided_slice %50 {offsets = [0, 88], sizes = [8, 8], strides = [1, 1]} : vector<8x96xbf16> to vector<8x8xbf16>
      "tpu.trace_start"() <{level = 10 : i32, message = "td,sd->ts"}> : () -> ()
      %cst_48 = arith.constant dense<0.000000e+00> : vector<8x8xf32>
      %120 = tpu.matmul %117, %118, %cst_48 {dimension_numbers = #tpu.dot_dimension_numbers<[1], [1], [0], [0], [0, 0, 1, 0], [], []>} : vector<8x8xbf16>, vector<8x8xbf16>, vector<8x8xf32> -> vector<8x8xf32>
      "tpu.trace_stop"() : () -> ()
      %cst_49 = arith.constant 0.353553385 : f32
      %121 = vector.broadcast %cst_49 : f32 to vector<8x8xf32>
      %122 = arith.mulf %120, %121 : vector<8x8xf32>
      %123 = arith.addf %122, %56 : vector<8x8xf32>
      %cst_50 = arith.constant dense<0xFF800000> : vector<8xf32>
      %124 = vector.multi_reduction <maximumf>, %123, %cst_50 [1] : vector<8x8xf32> to vector<8xf32>
      %125 = vector.shape_cast %124 : vector<8xf32> to vector<8x1xf32>
      %126 = vector.broadcast %125 : vector<8x1xf32> to vector<8x8xf32>
      %127 = arith.subf %123, %126 : vector<8x8xf32>
      %128 = math.exp %127 : vector<8x8xf32>
      %cst_51 = arith.constant dense<0.000000e+00> : vector<8xf32>
      %129 = vector.multi_reduction <add>, %128, %cst_51 [1] : vector<8x8xf32> to vector<8xf32>
      %130 = vector.shape_cast %129 : vector<8xf32> to vector<8x1xf32>
      %131 = tpu.reciprocal %130 {approx = true} : vector<8x1xf32> -> vector<8x1xf32>
      %132 = vector.broadcast %131 : vector<8x1xf32> to vector<8x8xf32>
      %133 = arith.mulf %128, %132 : vector<8x8xf32>
      %134 = arith.truncf %133 : vector<8x8xf32> to vector<8x8xbf16>
      %cst_52 = arith.constant dense<0.000000e+00> : vector<8x8xf32>
      %135 = tpu.matmul %134, %119, %cst_52 {dimension_numbers = #tpu.dot_dimension_numbers<[1], [0], [0], [1], [0, 0, 1, 1], [], []>} : vector<8x8xbf16>, vector<8x8xbf16>, vector<8x8xf32> -> vector<8x8xf32>
      %136 = arith.truncf %135 : vector<8x8xf32> to vector<8x8xbf16>
      %137 = tpu.concatenate %76, %96, %116, %136 in 1 : vector<8x8xbf16>, vector<8x8xbf16>, vector<8x8xbf16>, vector<8x8xbf16> -> vector<8x32xbf16>
      %c0_53 = arith.constant 0 : index
      %c0_54 = arith.constant 0 : index
      %138 = vector.load %arg6[%c0_53, %c0_54] : memref<32x32xbf16, #tpu.memory_space<vmem>>, vector<32x32xbf16>
      %cst_55 = arith.constant dense<0.000000e+00> : vector<8x32xf32>
      %139 = tpu.matmul %137, %138, %cst_55 {dimension_numbers = #tpu.dot_dimension_numbers<[1], [0], [0], [1], [0, 0, 1, 1], [], []>} : vector<8x32xbf16>, vector<32x32xbf16>, vector<8x32xf32> -> vector<8x32xf32>
      %140 = arith.addf %22, %139 : vector<8x32xf32>
      %141 = vector.shape_cast %140 : vector<8x32xf32> to vector<1x8x32xf32>
      %c0_56 = arith.constant 0 : index
      %c0_57 = arith.constant 0 : index
      %c0_58 = arith.constant 0 : index
      %142 = vector.load %arg11[%c0_56, %c0_57, %c0_58] : memref<1x8x32xf32, #tpu.memory_space<vmem>>, vector<1x8x32xf32>
      tpu.vector_store %arg11[%c0_56, %c0_57, %c0_58], %141 {strides = array<i32>} : memref<1x8x32xf32, #tpu.memory_space<vmem>>, vector<1x8x32xf32>,
      %c0_59 = arith.constant 0 : index
      %c0_60 = arith.constant 0 : index
      %143 = vector.load %arg7[%c0_59, %c0_60] : memref<1x32xf32, #tpu.memory_space<vmem>>, vector<1x32xf32>
      %c0_61 = arith.constant 0 : index
      %c0_62 = arith.constant 0 : index
      %144 = vector.load %arg8[%c0_61, %c0_62] : memref<1x32xf32, #tpu.memory_space<vmem>>, vector<1x32xf32>
      %cst_63 = arith.constant dense<0.000000e+00> : vector<8xf32>
      %145 = vector.multi_reduction <add>, %140, %cst_63 [1] : vector<8x32xf32> to vector<8xf32>
      %146 = vector.shape_cast %145 : vector<8xf32> to vector<8x1xf32>
      %cst_64 = arith.constant 3.200000e+01 : f32
      %147 = vector.broadcast %cst_64 : f32 to vector<8x1xf32>
      %148 = arith.divf %146, %147 : vector<8x1xf32>
      %149 = vector.broadcast %148 : vector<8x1xf32> to vector<8x32xf32>
      %150 = arith.subf %140, %149 : vector<8x32xf32>
      %151 = arith.mulf %150, %150 : vector<8x32xf32>
      %cst_65 = arith.constant dense<0.000000e+00> : vector<8xf32>
      %152 = vector.multi_reduction <add>, %151, %cst_65 [1] : vector<8x32xf32> to vector<8xf32>
      %153 = vector.shape_cast %152 : vector<8xf32> to vector<8x1xf32>
      %cst_66 = arith.constant 3.200000e+01 : f32
      %154 = vector.broadcast %cst_66 : f32 to vector<8x1xf32>
      %155 = arith.divf %153, %154 : vector<8x1xf32>
      %156 = vector.broadcast %148 : vector<8x1xf32> to vector<8x32xf32>
      %157 = arith.subf %140, %156 : vector<8x32xf32>
      %cst_67 = arith.constant 9.99999974E-6 : f32
      %158 = vector.broadcast %cst_67 : f32 to vector<8x1xf32>
      %159 = arith.addf %155, %158 : vector<8x1xf32>
      %160 = math.rsqrt %159 : vector<8x1xf32>
      %161 = vector.broadcast %160 : vector<8x1xf32> to vector<8x32xf32>
      %162 = arith.mulf %157, %161 : vector<8x32xf32>
      %163 = vector.broadcast %143 : vector<1x32xf32> to vector<8x32xf32>
      %164 = arith.mulf %162, %163 : vector<8x32xf32>
      %165 = vector.broadcast %144 : vector<1x32xf32> to vector<8x32xf32>
      %166 = arith.addf %164, %165 : vector<8x32xf32>
      %167 = arith.truncf %166 : vector<8x32xf32> to vector<8x32xbf16>
      %c0_68 = arith.constant 0 : index
      %c0_69 = arith.constant 0 : index
      %168 = vector.load %arg12[%c0_68, %c0_69] : memref<8x32xbf16, #tpu.memory_space<vmem>>, vector<8x32xbf16>
      tpu.vector_store %arg12[%c0_68, %c0_69], %167 {strides = array<i32>} : memref<8x32xbf16, #tpu.memory_space<vmem>>, vector<8x32xbf16>,
    } else {
    }
    %c0 = arith.constant 0 : index
    %c0_1 = arith.constant 0 : index
    %3 = vector.load %arg12[%c0, %c0_1] : memref<8x32xbf16, #tpu.memory_space<vmem>>, vector<8x32xbf16>
    %c0_2 = arith.constant 0 : index
    %c0_3 = arith.constant 0 : index
    %4 = vector.load %arg9[%c0_2, %c0_3] : memref<32x128xbf16, #tpu.memory_space<vmem>>, vector<32x128xbf16>
    %cst = arith.constant dense<0.000000e+00> : vector<8x128xf32>
    %5 = tpu.matmul %3, %4, %cst {dimension_numbers = #tpu.dot_dimension_numbers<[1], [0], [0], [1], [0, 0, 1, 1], [], []>} : vector<8x32xbf16>, vector<32x128xbf16>, vector<8x128xf32> -> vector<8x128xf32>
    %cst_4 = arith.constant 5.000000e-01 : f32
    %6 = vector.broadcast %cst_4 : f32 to vector<8x128xf32>
    %7 = arith.mulf %6, %5 : vector<8x128xf32>
    %cst_5 = arith.constant 1.41421354 : f32
    %8 = vector.broadcast %cst_5 : f32 to vector<8x128xf32>
    %9 = arith.divf %5, %8 : vector<8x128xf32>
    %10 = math.erf %9 : vector<8x128xf32>
    %cst_6 = arith.constant 1.000000e+00 : f32
    %11 = vector.broadcast %cst_6 : f32 to vector<8x128xf32>
    %12 = arith.addf %11, %10 : vector<8x128xf32>
    %13 = arith.mulf %7, %12 : vector<8x128xf32>
    %14 = arith.truncf %13 : vector<8x128xf32> to vector<8x128xbf16>
    %c0_7 = arith.constant 0 : index
    %c0_8 = arith.constant 0 : index
    %15 = vector.load %arg10[%c0_7, %c0_8] : memref<128x32xbf16, #tpu.memory_space<vmem>>, vector<128x32xbf16>
    %cst_9 = arith.constant dense<0.000000e+00> : vector<8x32xf32>
    %16 = tpu.matmul %14, %15, %cst_9 {dimension_numbers = #tpu.dot_dimension_numbers<[1], [0], [0], [1], [0, 0, 1, 1], [], []>} : vector<8x128xbf16>, vector<128x32xbf16>, vector<8x32xf32> -> vector<8x32xf32>
    %c0_10 = arith.constant 0 : index
    %c0_11 = arith.constant 0 : index
    %c0_12 = arith.constant 0 : index
    %17 = vector.load %arg11[%c0_10, %c0_11, %c0_12] : memref<1x8x32xf32, #tpu.memory_space<vmem>>, vector<1x8x32xf32>
    %18 = vector.shape_cast %16 : vector<8x32xf32> to vector<1x8x32xf32>
    %19 = arith.addf %17, %18 : vector<1x8x32xf32>
    %c0_13 = arith.constant 0 : index
    %c0_14 = arith.constant 0 : index
    %c0_15 = arith.constant 0 : index
    %20 = vector.load %arg11[%c0_13, %c0_14, %c0_15] : memref<1x8x32xf32, #tpu.memory_space<vmem>>, vector<1x8x32xf32>
    tpu.vector_store %arg11[%c0_13, %c0_14, %c0_15], %19 {strides = array<i32>} : memref<1x8x32xf32, #tpu.memory_space<vmem>>, vector<1x8x32xf32>,
    return
  }
  func.func @transform_0(%arg0: i32, %arg1: i32) -> (i32, i32, i32) {
    %c0_i32 = arith.constant 0 : i32
    %c0_i32_0 = arith.constant 0 : i32
    %c0_i32_1 = arith.constant 0 : i32
    return %arg0, %c0_i32, %c0_i32_0 : i32, i32, i32
  }
  func.func @transform_1(%arg0: i32, %arg1: i32) -> (i32, i32) {
    %c0_i32 = arith.constant 0 : i32
    %c0_i32_0 = arith.constant 0 : i32
    %c0_i32_1 = arith.constant 0 : i32
    return %c0_i32, %c0_i32_0 : i32, i32
  }
  func.func @transform_2(%arg0: i32, %arg1: i32) -> (i32, i32) {
    %c0_i32 = arith.constant 0 : i32
    %c0_i32_0 = arith.constant 0 : i32
    %c0_i32_1 = arith.constant 0 : i32
    return %c0_i32, %c0_i32_0 : i32, i32
  }
  func.func @transform_3(%arg0: i32, %arg1: i32) -> (i32, i32) {
    %c0_i32 = arith.constant 0 : i32
    %c0_i32_0 = arith.constant 0 : i32
    %c0_i32_1 = arith.constant 0 : i32
    return %c0_i32, %c0_i32_0 : i32, i32
  }
  func.func @transform_4(%arg0: i32, %arg1: i32) -> (i32, i32) {
    %c0_i32 = arith.constant 0 : i32
    %c0_i32_0 = arith.constant 0 : i32
    %c0_i32_1 = arith.constant 0 : i32
    return %c0_i32, %c0_i32_0 : i32, i32
  }
  func.func @transform_5(%arg0: i32, %arg1: i32) -> (i32, i32) {
    %c0_i32 = arith.constant 0 : i32
    %c0_i32_0 = arith.constant 0 : i32
    %c0_i32_1 = arith.constant 0 : i32
    return %c0_i32, %c0_i32_0 : i32, i32
  }
  func.func @transform_6(%arg0: i32, %arg1: i32) -> (i32, i32) {
    %c0_i32 = arith.constant 0 : i32
    %c0_i32_0 = arith.constant 0 : i32
    %c0_i32_1 = arith.constant 0 : i32
    return %c0_i32, %c0_i32_0 : i32, i32
  }
  func.func @transform_7(%arg0: i32, %arg1: i32) -> (i32, i32) {
    %c0_i32 = arith.constant 0 : i32
    %c0_i32_0 = arith.constant 0 : i32
    return %c0_i32, %arg1 : i32, i32
  }
  func.func @transform_8(%arg0: i32, %arg1: i32) -> (i32, i32) {
    %c0_i32 = arith.constant 0 : i32
    %c0_i32_0 = arith.constant 0 : i32
    return %arg1, %c0_i32 : i32, i32
  }
  func.func @transform_9(%arg0: i32, %arg1: i32) -> (i32, i32, i32) {
    %c0_i32 = arith.constant 0 : i32
    %c0_i32_0 = arith.constant 0 : i32
    %c0_i32_1 = arith.constant 0 : i32
    return %arg0, %c0_i32, %c0_i32_0 : i32, i32, i32
  }
}

</mosaic_0001>

<llo_original>
// kernel: tpu_custom_call.1
$region0: #{tpu_custom_call.1}
  #allocation0 [shape = 'u32[]', space=smem, size = 0x4, offset = 0x4, fixed_abs, tag = 'smem constant byte address 0x4 - core index']
  #allocation1 [shape = 'u32[144,128]{1,0:T(1,128)}', space=vmem, size = 0x12000, scoped, tag = 'internal scratch']
  #allocation2 [shape = 'bf16[8,32]{1,0:T(8,128)(2,1)}', space=vmem, size = 0x800, scoped, tag = 'scratch operand']
  %s0 = inlined_call_operand.vmem [shape: f32[2,8,32], index: 0, kind: input, shape index: {}]
  %s1 = inlined_call_operand.vmem [shape: f32[1,32], index: 1, kind: input, shape index: {}]
  %s2 = inlined_call_operand.vmem [shape: f32[1,32], index: 2, kind: input, shape index: {}]
  %s3 = inlined_call_operand.vmem [shape: bf16[32,96], index: 3, kind: input, shape index: {}]
  %s4 = inlined_call_operand.vmem [shape: bf16[32,32], index: 4, kind: input, shape index: {}]
  %s5 = inlined_call_operand.vmem [shape: f32[1,32], index: 5, kind: input, shape index: {}]
  %s6 = inlined_call_operand.vmem [shape: f32[1,32], index: 6, kind: input, shape index: {}]
  %s7 = inlined_call_operand.vmem [shape: bf16[32,128], index: 7, kind: input, shape index: {}]
  %s8 = inlined_call_operand.vmem [shape: bf16[128,32], index: 8, kind: input, shape index: {}]
  %s9 = inlined_call_operand.hbm [shape: f32[2,8,32], index: 9, kind: output, shape index: {}]
  %s10 = sld [smem:[#allocation0]]
  $region73: #{tpu_custom_call.1} parent=0
    _
  %s12 = ssub.s32 1, %s10
  %s13 = scalar_select 0, %s12, %s10
  $region1: #{tpu_custom_call.1} parent=0
    #allocation3 [shape = 'u8[8192]{0}', space=vmem, size = 0x2000, scoped, tag = 'output window, operand 0']
    #allocation4 [shape = 's32[2]{0}', space=sflag, size = 0x8, scoped, tag = 'scoped memory for tpu_custom_call.1']
    %14 = vsyncpa [#allocation4], 0
    %s15 = scalar_lea.sflag [#allocation4], 1
    %16 = vsyncpa %s15, 0
    loop: start=0, step=1, limit=4
    $region2: #{tpu_custom_call.1} parent=1 // loop_pre_header
      _
    $region3: #{tpu_custom_call.1} parent=1 // loop_header
      %s18 = sphi 0, %s22
      %p19 = scmp.ge.s32.totalorder %s18, 4
      %s25 = sphi 0, %s37
      %s26 = sphi 0, %s33
      %s27 = sphi 0, %s25
      %s28 = sphi 0, %s26
      %s29 = sphi 0, %s27
      %s30 = sphi 0, %s28
      %s40 = sphi 0, %s42
      %s43 = sphi 0, %s40
      %s44 = sphi 0, %s43
      %s60 = sphi 0, %s44
      %s64 = sphi 0, %s64
      %s66 = sphi 0, %s64
      %s67 = sphi 0, %s66
      %s81 = sphi 0, %s67
      %s85 = sphi 0, %s85
      %s87 = sphi 0, %s85
      %s88 = sphi 0, %s87
      %s102 = sphi 0, %s88
      %s106 = sphi 0, %s106
      %s108 = sphi 0, %s106
      %s109 = sphi 0, %s108
      %s123 = sphi 0, %s109
      %s127 = sphi 0, %s127
      %s129 = sphi 0, %s127
      %s130 = sphi 0, %s129
      %s144 = sphi 0, %s130
      %s148 = sphi 0, %s148
      %s150 = sphi 0, %s148
      %s151 = sphi 0, %s150
      %s165 = sphi 0, %s151
      %s169 = sphi 0, %s169
      %s171 = sphi 0, %s169
      %s172 = sphi 0, %s171
      %s186 = sphi 0, %s172
      %s192 = sphi 0, %s194
      %s195 = sphi 0, %s192
      %s196 = sphi 0, %s195
      %s212 = sphi 0, %s196
      %s218 = sphi 0, %s220
      %s221 = sphi 0, %s218
      %s222 = sphi 0, %s221
      %s238 = sphi 0, %s222
      %s244 = sphi 0, %s246
      %s247 = sphi 0, %s244
      %s248 = sphi 0, %s247
      %s264 = sphi 0, %s248
    $region4: #{tpu_custom_call.1} parent=1 // loop_header_branch
      %21 = sbr.rel (%p19) target = $region8
    $region5: #{tpu_custom_call.1} parent=1 // loop_body
      %s23 = ssub.s32 %s18, 1
      %s24 = ssub.s32 %s18, 2
      %s31 = sadd.s32 1, %s26
      %p32 = scmp.ge.s32.totalorder %s31, 1
      %s33 = scalar_select %p32, 0, %s31
      %s34 = sadd.s32 1, %s25
      %s35 = scalar_select %p32, %s34, %s25
      %p36 = scmp.ge.s32.totalorder %s35, 2
      %s37 = scalar_select %p36, 0, %s35
      %s38 = ssub.s32 %s25, %s37
      %p39 = scmp.eq.s32.totalorder %s38, 0
      %s41 = sadd.s32 %s40, 1
      %s42 = scalar_select %p39, %s40, %s41
      %p45 = pneg %p39
      %p46 = scmp.eq.s32.totalorder %s18, 1
      %p47 = por %p45, %p46
      %p48 = scmp.ne.s32.totalorder %s40, %s43
      %p49 = scmp.eq.s32.totalorder %s18, 0
      %p50 = por %p48, %p49
      %p51 = scmp.ne.s32.totalorder %s40, %s43
      %p52 = scmp.eq.s32.totalorder %s23, 1
      %p53 = por %p51, %p52
      %p54 = scmp.ne.s32.totalorder %s43, %s44
      %p55 = scmp.eq.s32.totalorder %s23, 0
      %p56 = por %p54, %p55
      %p57 = scmp.ne.s32.totalorder %s43, %s44
      %p58 = scmp.eq.s32.totalorder %s24, 1
      %p59 = por %p57, %p58
      %p61 = scmp.ne.s32.totalorder %s44, %s60
      %p62 = scmp.eq.s32.totalorder %s24, 0
      %p63 = por %p61, %p62
      %s65 = sadd.s32 %s64, 1
      %p68 = scmp.eq.s32.totalorder %s18, 1
      %p69 = scmp.ne.s32.totalorder %s64, %s66
      %p70 = scmp.eq.s32.totalorder %s18, 0
      %p71 = por %p69, %p70
      %p72 = scmp.ne.s32.totalorder %s64, %s66
      %p73 = scmp.eq.s32.totalorder %s23, 1
      %p74 = por %p72, %p73
      %p75 = scmp.ne.s32.totalorder %s66, %s67
      %p76 = scmp.eq.s32.totalorder %s23, 0
      %p77 = por %p75, %p76
      %p78 = scmp.ne.s32.totalorder %s66, %s67
      %p79 = scmp.eq.s32.totalorder %s24, 1
      %p80 = por %p78, %p79
      %p82 = scmp.ne.s32.totalorder %s67, %s81
      %p83 = scmp.eq.s32.totalorder %s24, 0
      %p84 = por %p82, %p83
      %s86 = sadd.s32 %s85, 1
      %p89 = scmp.eq.s32.totalorder %s18, 1
      %p90 = scmp.ne.s32.totalorder %s85, %s87
      %p91 = scmp.eq.s32.totalorder %s18, 0
      %p92 = por %p90, %p91
      %p93 = scmp.ne.s32.totalorder %s85, %s87
      %p94 = scmp.eq.s32.totalorder %s23, 1
      %p95 = por %p93, %p94
      %p96 = scmp.ne.s32.totalorder %s87, %s88
      %p97 = scmp.eq.s32.totalorder %s23, 0
      %p98 = por %p96, %p97
      %p99 = scmp.ne.s32.totalorder %s87, %s88
      %p100 = scmp.eq.s32.totalorder %s24, 1
      %p101 = por %p99, %p100
      %p103 = scmp.ne.s32.totalorder %s88, %s102
      %p104 = scmp.eq.s32.totalorder %s24, 0
      %p105 = por %p103, %p104
      %s107 = sadd.s32 %s106, 1
      %p110 = scmp.eq.s32.totalorder %s18, 1
      %p111 = scmp.ne.s32.totalorder %s106, %s108
      %p112 = scmp.eq.s32.totalorder %s18, 0
      %p113 = por %p111, %p112
      %p114 = scmp.ne.s32.totalorder %s106, %s108
      %p115 = scmp.eq.s32.totalorder %s23, 1
      %p116 = por %p114, %p115
      %p117 = scmp.ne.s32.totalorder %s108, %s109
      %p118 = scmp.eq.s32.totalorder %s23, 0
      %p119 = por %p117, %p118
      %p120 = scmp.ne.s32.totalorder %s108, %s109
      %p121 = scmp.eq.s32.totalorder %s24, 1
      %p122 = por %p120, %p121
      %p124 = scmp.ne.s32.totalorder %s109, %s123
      %p125 = scmp.eq.s32.totalorder %s24, 0
      %p126 = por %p124, %p125
      %s128 = sadd.s32 %s127, 1
      %p131 = scmp.eq.s32.totalorder %s18, 1
      %p132 = scmp.ne.s32.totalorder %s127, %s129
      %p133 = scmp.eq.s32.totalorder %s18, 0
      %p134 = por %p132, %p133
      %p135 = scmp.ne.s32.totalorder %s127, %s129
      %p136 = scmp.eq.s32.totalorder %s23, 1
      %p137 = por %p135, %p136
      %p138 = scmp.ne.s32.totalorder %s129, %s130
      %p139 = scmp.eq.s32.totalorder %s23, 0
      %p140 = por %p138, %p139
      %p141 = scmp.ne.s32.totalorder %s129, %s130
      %p142 = scmp.eq.s32.totalorder %s24, 1
      %p143 = por %p141, %p142
      %p145 = scmp.ne.s32.totalorder %s130, %s144
      %p146 = scmp.eq.s32.totalorder %s24, 0
      %p147 = por %p145, %p146
      %s149 = sadd.s32 %s148, 1
      %p152 = scmp.eq.s32.totalorder %s18, 1
      %p153 = scmp.ne.s32.totalorder %s148, %s150
      %p154 = scmp.eq.s32.totalorder %s18, 0
      %p155 = por %p153, %p154
      %p156 = scmp.ne.s32.totalorder %s148, %s150
      %p157 = scmp.eq.s32.totalorder %s23, 1
      %p158 = por %p156, %p157
      %p159 = scmp.ne.s32.totalorder %s150, %s151
      %p160 = scmp.eq.s32.totalorder %s23, 0
      %p161 = por %p159, %p160
      %p162 = scmp.ne.s32.totalorder %s150, %s151
      %p163 = scmp.eq.s32.totalorder %s24, 1
      %p164 = por %p162, %p163
      %p166 = scmp.ne.s32.totalorder %s151, %s165
      %p167 = scmp.eq.s32.totalorder %s24, 0
      %p168 = por %p166, %p167
      %s170 = sadd.s32 %s169, 1
      %p173 = scmp.eq.s32.totalorder %s18, 1
      %p174 = scmp.ne.s32.totalorder %s169, %s171
      %p175 = scmp.eq.s32.totalorder %s18, 0
      %p176 = por %p174, %p175
      %p177 = scmp.ne.s32.totalorder %s169, %s171
      %p178 = scmp.eq.s32.totalorder %s23, 1
      %p179 = por %p177, %p178
      %p180 = scmp.ne.s32.totalorder %s171, %s172
      %p181 = scmp.eq.s32.totalorder %s23, 0
      %p182 = por %p180, %p181
      %p183 = scmp.ne.s32.totalorder %s171, %s172
      %p184 = scmp.eq.s32.totalorder %s24, 1
      %p185 = por %p183, %p184
      %p187 = scmp.ne.s32.totalorder %s172, %s186
      %p188 = scmp.eq.s32.totalorder %s24, 0
      %p189 = por %p187, %p188
      %s190 = ssub.s32 %s26, %s33
      %p191 = scmp.eq.s32.totalorder %s190, 0
      %s193 = sadd.s32 %s192, 1
      %s194 = scalar_select %p191, %s192, %s193
      %p197 = pneg %p191
      %p198 = scmp.eq.s32.totalorder %s18, 1
      %p199 = por %p197, %p198
      %p200 = scmp.ne.s32.totalorder %s192, %s195
      %p201 = scmp.eq.s32.totalorder %s18, 0
      %p202 = por %p200, %p201
      %p203 = scmp.ne.s32.totalorder %s192, %s195
      %p204 = scmp.eq.s32.totalorder %s23, 1
      %p205 = por %p203, %p204
      %p206 = scmp.ne.s32.totalorder %s195, %s196
      %p207 = scmp.eq.s32.totalorder %s23, 0
      %p208 = por %p206, %p207
      %p209 = scmp.ne.s32.totalorder %s195, %s196
      %p210 = scmp.eq.s32.totalorder %s24, 1
      %p211 = por %p209, %p210
      %p213 = scmp.ne.s32.totalorder %s196, %s212
      %p214 = scmp.eq.s32.totalorder %s24, 0
      %p215 = por %p213, %p214
      %s216 = ssub.s32 %s26, %s33
      %p217 = scmp.eq.s32.totalorder %s216, 0
      %s219 = sadd.s32 %s218, 1
      %s220 = scalar_select %p217, %s218, %s219
      %p223 = pneg %p217
      %p224 = scmp.eq.s32.totalorder %s18, 1
      %p225 = por %p223, %p224
      %p226 = scmp.ne.s32.totalorder %s218, %s221
      %p227 = scmp.eq.s32.totalorder %s18, 0
      %p228 = por %p226, %p227
      %p229 = scmp.ne.s32.totalorder %s218, %s221
      %p230 = scmp.eq.s32.totalorder %s23, 1
      %p231 = por %p229, %p230
      %p232 = scmp.ne.s32.totalorder %s221, %s222
      %p233 = scmp.eq.s32.totalorder %s23, 0
      %p234 = por %p232, %p233
      %p235 = scmp.ne.s32.totalorder %s221, %s222
      %p236 = scmp.eq.s32.totalorder %s24, 1
      %p237 = por %p235, %p236
      %p239 = scmp.ne.s32.totalorder %s222, %s238
      %p240 = scmp.eq.s32.totalorder %s24, 0
      %p241 = por %p239, %p240
      %s242 = ssub.s32 %s25, %s37
      %p243 = scmp.eq.s32.totalorder %s242, 0
      %s245 = sadd.s32 %s244, 1
      %s246 = scalar_select %p243, %s244, %s245
      %p249 = pneg %p243
      %p250 = scmp.eq.s32.totalorder %s18, 1
      %p251 = por %p249, %p250
      %p252 = scmp.ne.s32.totalorder %s244, %s247
      %p253 = scmp.eq.s32.totalorder %s18, 0
      %p254 = por %p252, %p253
      %p255 = scmp.ne.s32.totalorder %s244, %s247
      %p256 = scmp.eq.s32.totalorder %s23, 1
      %p257 = por %p255, %p256
      %p258 = scmp.ne.s32.totalorder %s247, %s248
      %p259 = scmp.eq.s32.totalorder %s23, 0
      %p260 = por %p258, %p259
      %p261 = scmp.ne.s32.totalorder %s247, %s248
      %p262 = scmp.eq.s32.totalorder %s24, 1
      %p263 = por %p261, %p262
      %p265 = scmp.ne.s32.totalorder %s248, %s264
      %p266 = scmp.eq.s32.totalorder %s24, 0
      %p267 = por %p265, %p266
      %p268 = scmp.le.s32.totalorder 1, %s18
      %p269 = scmp.lt.s32.totalorder %s18, 3
      %p270 = pnand %p268, %p269
      %p271 = pneg %p270
      // Predicated region
      $region9: #{tpu_custom_call.1} parent=5 // pred_check
        _
      $region10: #{tpu_custom_call.1} parent=5 // pred_check_branch
        %273 = sbr.rel (%p270) target = $region12
      $region11: #{tpu_custom_call.1} parent=5 // pred_region
        %s274 = ssub.s32 %s18, 1
        // Predicated region
        $region13: #{tpu_custom_call.1} parent=11 // pred_check
          %p275 = pneg %p77
        $region14: #{tpu_custom_call.1} parent=11 // pred_check_branch
          %277 = sbr.rel (%p275) target = $region16
        $region15: #{tpu_custom_call.1} parent=11 // pred_region
          _
        $region16: #{tpu_custom_call.1} parent=11 // pred_fallthru
          _
        // Predicated region
        $region17: #{tpu_custom_call.1} parent=11 // pred_check
          %p278 = pneg %p98
        $region18: #{tpu_custom_call.1} parent=11 // pred_check_branch
          %280 = sbr.rel (%p278) target = $region20
        $region19: #{tpu_custom_call.1} parent=11 // pred_region
          _
        $region20: #{tpu_custom_call.1} parent=11 // pred_fallthru
          _
        // Predicated region
        $region21: #{tpu_custom_call.1} parent=11 // pred_check
          %p281 = pneg %p119
        $region22: #{tpu_custom_call.1} parent=11 // pred_check_branch
          %283 = sbr.rel (%p281) target = $region24
        $region23: #{tpu_custom_call.1} parent=11 // pred_region
          _
        $region24: #{tpu_custom_call.1} parent=11 // pred_fallthru
          _
        // Predicated region
        $region25: #{tpu_custom_call.1} parent=11 // pred_check
          %p284 = pneg %p140
        $region26: #{tpu_custom_call.1} parent=11 // pred_check_branch
          %286 = sbr.rel (%p284) target = $region28
        $region27: #{tpu_custom_call.1} parent=11 // pred_region
          _
        $region28: #{tpu_custom_call.1} parent=11 // pred_fallthru
          _
        // Predicated region
        $region29: #{tpu_custom_call.1} parent=11 // pred_check
          %p287 = pneg %p161
        $region30: #{tpu_custom_call.1} parent=11 // pred_check_branch
          %289 = sbr.rel (%p287) target = $region32
        $region31: #{tpu_custom_call.1} parent=11 // pred_region
          _
        $region32: #{tpu_custom_call.1} parent=11 // pred_fallthru
          _
        // Predicated region
        $region33: #{tpu_custom_call.1} parent=11 // pred_check
          %p290 = pneg %p182
        $region34: #{tpu_custom_call.1} parent=11 // pred_check_branch
          %292 = sbr.rel (%p290) target = $region36
        $region35: #{tpu_custom_call.1} parent=11 // pred_region
          _
        $region36: #{tpu_custom_call.1} parent=11 // pred_fallthru
          _
        // Predicated region
        $region37: #{tpu_custom_call.1} parent=11 // pred_check
          %p293 = pneg %p208
        $region38: #{tpu_custom_call.1} parent=11 // pred_check_branch
          %295 = sbr.rel (%p293) target = $region40
        $region39: #{tpu_custom_call.1} parent=11 // pred_region
          %p296 = scmp.lt.s32.totalorder %s28, 0
          %s297 = scalar_select %p296, %s28, 0
          %s298 = smul.addr %s297, 4
          %s299 = scalar_lea.vmem %s7, %s298
        $region40: #{tpu_custom_call.1} parent=11 // pred_fallthru
          _
        // Predicated region
        $region41: #{tpu_custom_call.1} parent=11 // pred_check
          %p300 = pneg %p234
        $region42: #{tpu_custom_call.1} parent=11 // pred_check_branch
          %302 = sbr.rel (%p300) target = $region44
        $region43: #{tpu_custom_call.1} parent=11 // pred_region
          %s303 = smul.u32 16, %s28
          %p304 = scmp.lt.s32.totalorder %s303, 15
          %s305 = scalar_select %p304, %s303, 15
          %s306 = smul.addr %s305, 4
          %s307 = scalar_lea.vmem %s8, %s306
          %s308 = smul.u32 16, %s28
        $region44: #{tpu_custom_call.1} parent=11 // pred_fallthru
          _
      $region12: #{tpu_custom_call.1} parent=5 // pred_fallthru
        _
      %p309 = scmp.lt.s32.totalorder %s18, 2
      // Predicated region
      $region45: #{tpu_custom_call.1} parent=5 // pred_check
        %p310 = pneg %p309
      $region46: #{tpu_custom_call.1} parent=5 // pred_check_branch
        %312 = sbr.rel (%p310) target = $region48
      $region47: #{tpu_custom_call.1} parent=5 // pred_region
        // Predicated region
        $region49: #{tpu_custom_call.1} parent=47 // pred_check
          %p313 = pneg %p50
        $region50: #{tpu_custom_call.1} parent=47 // pred_check_branch
          %315 = sbr.rel (%p313) target = $region52
        $region51: #{tpu_custom_call.1} parent=47 // pred_region
          %p316 = scmp.lt.s32.totalorder %s25, 1
          %s317 = scalar_select %p316, %s25, 1
          %s318 = smul.addr %s317, 8
          %s319 = scalar_lea.vmem %s0, %s318
        $region52: #{tpu_custom_call.1} parent=47 // pred_fallthru
          _
      $region48: #{tpu_custom_call.1} parent=5 // pred_fallthru
        _
      %p320 = scmp.le.s32.totalorder 1, %s18
      %p321 = scmp.lt.s32.totalorder %s18, 3
      %p322 = pnand %p320, %p321
      %p323 = pneg %p322
      // Predicated region
      $region53: #{tpu_custom_call.1} parent=5 // pred_check
        _
      $region54: #{tpu_custom_call.1} parent=5 // pred_check_branch
        %325 = sbr.rel (%p322) target = $region56
      $region55: #{tpu_custom_call.1} parent=5 // pred_region
        %s326 = ssub.s32 %s18, 1
        %p327 = scmp.lt.s32.totalorder %s27, 1
        %s328 = scalar_select %p327, %s27, 1
        %s329 = smul.addr %s328, 8
        %s330 = scalar_lea.vmem %s0, %s329
        %p331 = pneg %p56
        %p332 = pneg %p53
        %p333 = pneg %p77
        %p334 = pneg %p74
        %p335 = pneg %p98
        %p336 = pneg %p95
        %p337 = pneg %p119
        %p338 = pneg %p116
        %p339 = pneg %p140
        %p340 = pneg %p137
        %p341 = pneg %p161
        %p342 = pneg %p158
        %p343 = pneg %p182
        %p344 = pneg %p179
        %p345 = scmp.lt.s32.totalorder %s28, 0
        %s346 = scalar_select %p345, %s28, 0
        %s347 = smul.addr %s346, 4
        %s348 = scalar_lea.vmem %s7, %s347
        %p349 = pneg %p208
        %p350 = pneg %p205
        %s351 = smul.u32 16, %s28
        %p352 = scmp.lt.s32.totalorder %s351, 15
        %s353 = scalar_select %p352, %s351, 15
        %s354 = smul.addr %s353, 4
        %s355 = scalar_lea.vmem %s8, %s354
        %p356 = pneg %p234
        %p357 = pneg %p231
        %p358 = pneg %p260
        %p359 = pneg %p257
        %s360 = sand.u32 %s247, 1
        %s361 = scalar_lea.sflag [#allocation4], %s360
        %s362 = sand.u32 %s247, 1
        %s363 = smul.addr %s362, 8
        %s364 = scalar_lea.vmem [#allocation3], %s363
        %p365 = scmp.lt.s32.totalorder %s27, 1
        %s366 = scalar_select %p365, %s27, 1
        %s367 = smul.addr %s366, 8
        %s368 = scalar_lea.vmem %s0, %s367
        %p369 = scmp.lt.s32.totalorder %s28, 0
        %s370 = scalar_select %p369, %s28, 0
        %s371 = smul.addr %s370, 4
        %s372 = scalar_lea.vmem %s7, %s371
        %s373 = smul.u32 16, %s28
        %p374 = scmp.lt.s32.totalorder %s373, 15
        %s375 = scalar_select %p374, %s373, 15
        %s376 = smul.addr %s375, 4
        %s377 = scalar_lea.vmem %s8, %s376
        %s378 = smul.u32 16, %s28
        %p380 = scmp.eq.s32.totalorder %s28, 0
        // Predicated region
        $region57: #{tpu_custom_call.1} parent=55 // pred_check
          %p381 = pneg %p380
        $region58: #{tpu_custom_call.1} parent=55 // pred_check_branch
          %383 = sbr.rel (%p381) target = $region60
        $region59: #{tpu_custom_call.1} parent=55 // pred_region
          %v384 = vld [vmem:[%s368] sm:$0xff]
          %v385 = vld [vmem:[%s1] sm:$0x1]
          %v386 = vld [vmem:[%s2] sm:$0x1]
          %vm387 = vcmask 261120
          %v388 = vsel %vm387, %v384, 0.0
          %389 = vadd.xlane.f32.xlu0 %v388
          %v390 = vpop.xlane.xlu0 %389
          %v391 = vrcp.pop 32.0
          %v392 = vmul.f32 %v390, %v391
          %v393 = vsub.f32 %v384, %v392
          %v394 = vmul.f32 %v393, %v393
          %v395 = vsel %vm387, %v394, 0.0
          %396 = vadd.xlane.f32.xlu0 %v395
          %v397 = vpop.xlane.xlu0 %396
          %v398 = vmul.f32 %v397, %v391
          %v399 = vadd.f32 %v398, 1e-05
          %v400 = vrsqrt.pop %v399
          %v401 = vmul.f32 %v393, %v400
          %v403 = vlaneseq
          %v404 = vshrl.u32 %v403, 7
          %v405 = vsub.s32 0, %v404
          %v406 = vrot.slane %v385, %v405
          %v408 = vmul.f32 %v401, %v406
          %v410 = vlaneseq
          %v411 = vshrl.u32 %v410, 7
          %v412 = vsub.s32 0, %v411
          %v413 = vrot.slane %v386, %v412
          %v415 = vadd.f32 %v408, %v413
          %v416 = vpack.c.bf16 %v415, %v415
          %v417 = vld [vmem:[%s3] sm:$0xf]
          %v418 = vld [vmem:[%s3 + $0x4] sm:$0xf]
          %v419 = vld [vmem:[%s3 + $0x8] sm:$0xf]
          %v420 = vld [vmem:[%s3 + $0xc] sm:$0xf]
          %v425 = vunpack.c.l.b16 %v417
          %v426 = vunpack.c.l.b16 %v418
          %v427 = vunpack.c.l.b16 %v419
          %v428 = vunpack.c.l.b16 %v420
          %v429 = vpack.c.b16 %v426, %v425
          %v430 = vpack.c.b16 %v428, %v427
          %v434 = vsel %vm387, %v416, 0
          %436 = vmatprep.subr.bf16.mxu0 0
          %437 = vmatpush1.bf16.msra.mxu0 0
          %438 = vmatprep.subr.bf16.mxu0 0
          %439 = vmatpush1.bf16.msra.mxu0 0
          %440 = vmatprep.subr.bf16.mxu0 0
          %441 = vmatpush1.bf16.msra.mxu0 0
          %442 = vmatprep.subr.bf16.mxu0 0
          %443 = vmatpush1.bf16.msra.mxu0 0
          %444 = vmatprep.subr.bf16.mxu0 0
          %445 = vmatpush1.bf16.msra.mxu0 0
          %446 = vmatprep.subr.bf16.mxu0 0
          %447 = vmatpush1.bf16.msra.mxu0 0
          %448 = vmatprep.subr.bf16.mxu0 0
          %449 = vmatpush1.bf16.msra.mxu0 %v430
          %450 = vmatprep.subr.bf16.mxu0 0
          %451 = vmatpush1.bf16.msra.mxu0 %v429
          %452 = vmatprep.subr.bf16.mxu0 0
          %453 = vmatpush2.bf16.msra.mxu0 0
          %454 = vmatprep.subr.bf16.mxu0 0
          %455 = vmatpush2.bf16.msra.mxu0 0
          %456 = vmatprep.subr.bf16.mxu0 0
          %457 = vmatpush2.bf16.msra.mxu0 0
          %458 = vmatprep.subr.bf16.mxu0 0
          %459 = vmatpush2.bf16.msra.mxu0 0
          %460 = vmatprep.subr.bf16.mxu0 0
          %461 = vmatpush2.bf16.msra.mxu0 0
          %462 = vmatprep.subr.bf16.mxu0 0
          %463 = vmatpush2.bf16.msra.mxu0 0
          %464 = vmatprep.subr.bf16.mxu0 0
          %465 = vmatpush2.bf16.msra.mxu0 0
          %466 = vmatprep.subr.bf16.mxu0 0
          %467 = vmatpush2.bf16.msra.mxu0 0
          %468 = vmatprep.mubr.bf16.mxu0 0
          %469 = vmatmul.mubr.bf16.gmra.mxu0 %v434
          %v470 = vpop.f32.mrf.mxu0
          %v471 = vadd.f32 0.0, %v470
          %v472 = vpop.f32.mrf.mxu0
          %v473 = vpop.f32.mrf.mxu0
          %v474 = vpop.f32.mrf.mxu0
          %475 = vdwg.mxu0
          %v476 = vpack.c.bf16 %v471, %v471
          %v477 = vlaneseq
          %v478 = vshrl.u32 %v477, 7
          %v479 = vlaneseq
          %v480 = vand.u32 %v479, 127
          %vm481 = vcmp.le.s32.totalorder %v480, %v478
          %v482 = vsel %vm481, 0.0, -1e+30
          %484 = vrot.lane.b32.xlu0 %v476, 96
          %v485 = vpop.permute.xlu0 %484
          %vm486 = vcmask 64512
          %v488 = vsel %vm486, %v476, 0
          %v491 = vsel %vm486, %v485, 0
          %493 = vmatprep.subr.bf16.mxu0 0
          %494 = vmatpush1.bf16.xpose.msra.mxu0 0
          %495 = vmatprep.subr.bf16.mxu0 0
          %496 = vmatpush1.bf16.xpose.msra.mxu0 0
          %497 = vmatprep.subr.bf16.mxu0 0
          %498 = vmatpush1.bf16.xpose.msra.mxu0 0
          %499 = vmatprep.subr.bf16.mxu0 0
          %500 = vmatpush1.bf16.xpose.msra.mxu0 0
          %501 = vmatprep.subr.bf16.mxu0 0
          %502 = vmatpush1.bf16.xpose.msra.mxu0 0
          %503 = vmatprep.subr.bf16.mxu0 0
          %504 = vmatpush1.bf16.xpose.msra.mxu0 0
          %505 = vmatprep.subr.bf16.mxu0 0
          %506 = vmatpush1.bf16.xpose.msra.mxu0 0
          %507 = vmatprep.subr.bf16.mxu0 0
          %508 = vmatpush1.bf16.xpose.msra.mxu0 %v491
          %509 = vmatprep.subr.bf16.mxu0 0
          %510 = vmatpush2.bf16.xpose.msra.mxu0 0
          %511 = vmatprep.subr.bf16.mxu0 0
          %512 = vmatpush2.bf16.xpose.msra.mxu0 0
          %513 = vmatprep.subr.bf16.mxu0 0
          %514 = vmatpush2.bf16.xpose.msra.mxu0 0
          %515 = vmatprep.subr.bf16.mxu0 0
          %516 = vmatpush2.bf16.xpose.msra.mxu0 0
          %517 = vmatprep.subr.bf16.mxu0 0
          %518 = vmatpush2.bf16.xpose.msra.mxu0 0
          %519 = vmatprep.subr.bf16.mxu0 0
          %520 = vmatpush2.bf16.xpose.msra.mxu0 0
          %521 = vmatprep.subr.bf16.mxu0 0
          %522 = vmatpush2.bf16.xpose.msra.mxu0 0
          %523 = vmatprep.subr.bf16.mxu0 0
          %524 = vmatpush2.bf16.xpose.msra.mxu0 0
          %525 = vmatprep.mubr.bf16.mxu0 0
          %526 = vmatmul.mubr.bf16.gmra.mxu0 %v488
          %v527 = vpop.f32.mrf.mxu0
          %v528 = vadd.f32 0.0, %v527
          %v529 = vpop.f32.mrf.mxu0
          %v530 = vpop.f32.mrf.mxu0
          %v531 = vpop.f32.mrf.mxu0
          %532 = vdwg.mxu0
          %v533 = vmul.f32 %v528, 0.35355338
          %v534 = vadd.f32 %v533, %v482
          %v535 = vsel %vm486, %v534, -inf
          %536 = vmax.xlane.f32.xlu0 %v535
          %v537 = vpop.xlane.xlu0 %536
          %v538 = vsub.f32 %v534, %v537
          %v539 = vmul.f32 %v538, 1.442695
          %v540 = vpow.pop %v539
          %v541 = vsel %vm486, %v540, 0.0
          %542 = vadd.xlane.f32.xlu0 %v541
          %v543 = vpop.xlane.xlu0 %542
          %v544 = vrcp.pop %v543
          %v545 = vmul.f32 %v540, %v544
          %v546 = vpack.c.bf16 %v545, %v545
          %547 = vrot.lane.b32.xlu0 %v476, 64
          %v548 = vpop.permute.xlu0 %547
          %v550 = vsel %vm486, %v546, 0
          %vm552 = vcmask 1043456
          %v554 = vsel %vm552, %v548, 0
          %556 = vmatprep.subr.bf16.mxu0 0
          %557 = vmatpush1.bf16.msra.mxu0 0
          %558 = vmatprep.subr.bf16.mxu0 0
          %559 = vmatpush1.bf16.msra.mxu0 0
          %560 = vmatprep.subr.bf16.mxu0 0
          %561 = vmatpush1.bf16.msra.mxu0 0
          %562 = vmatprep.subr.bf16.mxu0 0
          %563 = vmatpush1.bf16.msra.mxu0 0
          %564 = vmatprep.subr.bf16.mxu0 0
          %565 = vmatpush1.bf16.msra.mxu0 0
          %566 = vmatprep.subr.bf16.mxu0 0
          %567 = vmatpush1.bf16.msra.mxu0 0
          %568 = vmatprep.subr.bf16.mxu0 0
          %569 = vmatpush1.bf16.msra.mxu0 0
          %570 = vmatprep.subr.bf16.mxu0 0
          %571 = vmatpush1.bf16.msra.mxu0 %v554
          %572 = vmatprep.subr.bf16.mxu0 0
          %573 = vmatpush2.bf16.msra.mxu0 0
          %574 = vmatprep.subr.bf16.mxu0 0
          %575 = vmatpush2.bf16.msra.mxu0 0
          %576 = vmatprep.subr.bf16.mxu0 0
          %577 = vmatpush2.bf16.msra.mxu0 0
          %578 = vmatprep.subr.bf16.mxu0 0
          %579 = vmatpush2.bf16.msra.mxu0 0
          %580 = vmatprep.subr.bf16.mxu0 0
          %581 = vmatpush2.bf16.msra.mxu0 0
          %582 = vmatprep.subr.bf16.mxu0 0
          %583 = vmatpush2.bf16.msra.mxu0 0
          %584 = vmatprep.subr.bf16.mxu0 0
          %585 = vmatpush2.bf16.msra.mxu0 0
          %586 = vmatprep.subr.bf16.mxu0 0
          %587 = vmatpush2.bf16.msra.mxu0 0
          %588 = vmatprep.mubr.bf16.mxu0 0
          %589 = vmatmul.mubr.bf16.gmra.mxu0 %v550
          %v590 = vpop.f32.mrf.mxu0
          %v591 = vadd.f32 0.0, %v590
          %v592 = vpop.f32.mrf.mxu0
          %v593 = vpop.f32.mrf.mxu0
          %v594 = vpop.f32.mrf.mxu0
          %595 = vdwg.mxu0
          %v596 = vpack.c.bf16 %v591, %v591
          %597 = vrot.lane.b32.xlu0 %v476, 120
          %v598 = vpop.permute.xlu0 %597
          %599 = vrot.lane.b32.xlu0 %v476, 88
          %v600 = vpop.permute.xlu0 %599
          %v602 = vsel %vm486, %v598, 0
          %v605 = vsel %vm486, %v600, 0
          %607 = vmatprep.subr.bf16.mxu0 0
          %608 = vmatpush1.bf16.xpose.msra.mxu0 0
          %609 = vmatprep.subr.bf16.mxu0 0
          %610 = vmatpush1.bf16.xpose.msra.mxu0 0
          %611 = vmatprep.subr.bf16.mxu0 0
          %612 = vmatpush1.bf16.xpose.msra.mxu0 0
          %613 = vmatprep.subr.bf16.mxu0 0
          %614 = vmatpush1.bf16.xpose.msra.mxu0 0
          %615 = vmatprep.subr.bf16.mxu0 0
          %616 = vmatpush1.bf16.xpose.msra.mxu0 0
          %617 = vmatprep.subr.bf16.mxu0 0
          %618 = vmatpush1.bf16.xpose.msra.mxu0 0
          %619 = vmatprep.subr.bf16.mxu0 0
          %620 = vmatpush1.bf16.xpose.msra.mxu0 0
          %621 = vmatprep.subr.bf16.mxu0 0
          %622 = vmatpush1.bf16.xpose.msra.mxu0 %v605
          %623 = vmatprep.subr.bf16.mxu0 0
          %624 = vmatpush2.bf16.xpose.msra.mxu0 0
          %625 = vmatprep.subr.bf16.mxu0 0
          %626 = vmatpush2.bf16.xpose.msra.mxu0 0
          %627 = vmatprep.subr.bf16.mxu0 0
          %628 = vmatpush2.bf16.xpose.msra.mxu0 0
          %629 = vmatprep.subr.bf16.mxu0 0
          %630 = vmatpush2.bf16.xpose.msra.mxu0 0
          %631 = vmatprep.subr.bf16.mxu0 0
          %632 = vmatpush2.bf16.xpose.msra.mxu0 0
          %633 = vmatprep.subr.bf16.mxu0 0
          %634 = vmatpush2.bf16.xpose.msra.mxu0 0
          %635 = vmatprep.subr.bf16.mxu0 0
          %636 = vmatpush2.bf16.xpose.msra.mxu0 0
          %637 = vmatprep.subr.bf16.mxu0 0
          %638 = vmatpush2.bf16.xpose.msra.mxu0 0
          %639 = vmatprep.mubr.bf16.mxu0 0
          %640 = vmatmul.mubr.bf16.gmra.mxu0 %v602
          %v641 = vpop.f32.mrf.mxu0
          %v642 = vadd.f32 0.0, %v641
          %v643 = vpop.f32.mrf.mxu0
          %v644 = vpop.f32.mrf.mxu0
          %v645 = vpop.f32.mrf.mxu0
          %646 = vdwg.mxu0
          %v647 = vmul.f32 %v642, 0.35355338
          %v648 = vadd.f32 %v647, %v482
          %v649 = vsel %vm486, %v648, -inf
          %650 = vmax.xlane.f32.xlu0 %v649
          %v651 = vpop.xlane.xlu0 %650
          %v652 = vsub.f32 %v648, %v651
          %v653 = vmul.f32 %v652, 1.442695
          %v654 = vpow.pop %v653
          %v655 = vsel %vm486, %v654, 0.0
          %656 = vadd.xlane.f32.xlu0 %v655
          %v657 = vpop.xlane.xlu0 %656
          %v658 = vrcp.pop %v657
          %v659 = vmul.f32 %v654, %v658
          %v660 = vpack.c.bf16 %v659, %v659
          %661 = vrot.lane.b32.xlu0 %v476, 56
          %v662 = vpop.permute.xlu0 %661
          %v664 = vsel %vm486, %v660, 0
          %v667 = vsel %vm552, %v662, 0
          %669 = vmatprep.subr.bf16.mxu0 0
          %670 = vmatpush1.bf16.msra.mxu0 0
          %671 = vmatprep.subr.bf16.mxu0 0
          %672 = vmatpush1.bf16.msra.mxu0 0
          %673 = vmatprep.subr.bf16.mxu0 0
          %674 = vmatpush1.bf16.msra.mxu0 0
          %675 = vmatprep.subr.bf16.mxu0 0
          %676 = vmatpush1.bf16.msra.mxu0 0
          %677 = vmatprep.subr.bf16.mxu0 0
          %678 = vmatpush1.bf16.msra.mxu0 0
          %679 = vmatprep.subr.bf16.mxu0 0
          %680 = vmatpush1.bf16.msra.mxu0 0
          %681 = vmatprep.subr.bf16.mxu0 0
          %682 = vmatpush1.bf16.msra.mxu0 0
          %683 = vmatprep.subr.bf16.mxu0 0
          %684 = vmatpush1.bf16.msra.mxu0 %v667
          %685 = vmatprep.subr.bf16.mxu0 0
          %686 = vmatpush2.bf16.msra.mxu0 0
          %687 = vmatprep.subr.bf16.mxu0 0
          %688 = vmatpush2.bf16.msra.mxu0 0
          %689 = vmatprep.subr.bf16.mxu0 0
          %690 = vmatpush2.bf16.msra.mxu0 0
          %691 = vmatprep.subr.bf16.mxu0 0
          %692 = vmatpush2.bf16.msra.mxu0 0
          %693 = vmatprep.subr.bf16.mxu0 0
          %694 = vmatpush2.bf16.msra.mxu0 0
          %695 = vmatprep.subr.bf16.mxu0 0
          %696 = vmatpush2.bf16.msra.mxu0 0
          %697 = vmatprep.subr.bf16.mxu0 0
          %698 = vmatpush2.bf16.msra.mxu0 0
          %699 = vmatprep.subr.bf16.mxu0 0
          %700 = vmatpush2.bf16.msra.mxu0 0
          %701 = vmatprep.mubr.bf16.mxu0 0
          %702 = vmatmul.mubr.bf16.gmra.mxu0 %v664
          %v703 = vpop.f32.mrf.mxu0
          %v704 = vadd.f32 0.0, %v703
          %v705 = vpop.f32.mrf.mxu0
          %v706 = vpop.f32.mrf.mxu0
          %v707 = vpop.f32.mrf.mxu0
          %708 = vdwg.mxu0
          %v709 = vpack.c.bf16 %v704, %v704
          %710 = vrot.lane.b32.xlu0 %v476, 112
          %v711 = vpop.permute.xlu0 %710
          %712 = vrot.lane.b32.xlu0 %v476, 80
          %v713 = vpop.permute.xlu0 %712
          %v715 = vsel %vm486, %v711, 0
          %v718 = vsel %vm486, %v713, 0
          %720 = vmatprep.subr.bf16.mxu0 0
          %721 = vmatpush1.bf16.xpose.msra.mxu0 0
          %722 = vmatprep.subr.bf16.mxu0 0
          %723 = vmatpush1.bf16.xpose.msra.mxu0 0
          %724 = vmatprep.subr.bf16.mxu0 0
          %725 = vmatpush1.bf16.xpose.msra.mxu0 0
          %726 = vmatprep.subr.bf16.mxu0 0
          %727 = vmatpush1.bf16.xpose.msra.mxu0 0
          %728 = vmatprep.subr.bf16.mxu0 0
          %729 = vmatpush1.bf16.xpose.msra.mxu0 0
          %730 = vmatprep.subr.bf16.mxu0 0
          %731 = vmatpush1.bf16.xpose.msra.mxu0 0
          %732 = vmatprep.subr.bf16.mxu0 0
          %733 = vmatpush1.bf16.xpose.msra.mxu0 0
          %734 = vmatprep.subr.bf16.mxu0 0
          %735 = vmatpush1.bf16.xpose.msra.mxu0 %v718
          %736 = vmatprep.subr.bf16.mxu0 0
          %737 = vmatpush2.bf16.xpose.msra.mxu0 0
          %738 = vmatprep.subr.bf16.mxu0 0
          %739 = vmatpush2.bf16.xpose.msra.mxu0 0
          %740 = vmatprep.subr.bf16.mxu0 0
          %741 = vmatpush2.bf16.xpose.msra.mxu0 0
          %742 = vmatprep.subr.bf16.mxu0 0
          %743 = vmatpush2.bf16.xpose.msra.mxu0 0
          %744 = vmatprep.subr.bf16.mxu0 0
          %745 = vmatpush2.bf16.xpose.msra.mxu0 0
          %746 = vmatprep.subr.bf16.mxu0 0
          %747 = vmatpush2.bf16.xpose.msra.mxu0 0
          %748 = vmatprep.subr.bf16.mxu0 0
          %749 = vmatpush2.bf16.xpose.msra.mxu0 0
          %750 = vmatprep.subr.bf16.mxu0 0
          %751 = vmatpush2.bf16.xpose.msra.mxu0 0
          %752 = vmatprep.mubr.bf16.mxu0 0
          %753 = vmatmul.mubr.bf16.gmra.mxu0 %v715
          %v754 = vpop.f32.mrf.mxu0
          %v755 = vadd.f32 0.0, %v754
          %v756 = vpop.f32.mrf.mxu0
          %v757 = vpop.f32.mrf.mxu0
          %v758 = vpop.f32.mrf.mxu0
          %759 = vdwg.mxu0
          %v760 = vmul.f32 %v755, 0.35355338
          %v761 = vadd.f32 %v760, %v482
          %v762 = vsel %vm486, %v761, -inf
          %763 = vmax.xlane.f32.xlu0 %v762
          %v764 = vpop.xlane.xlu0 %763
          %v765 = vsub.f32 %v761, %v764
          %v766 = vmul.f32 %v765, 1.442695
          %v767 = vpow.pop %v766
          %v768 = vsel %vm486, %v767, 0.0
          %769 = vadd.xlane.f32.xlu0 %v768
          %v770 = vpop.xlane.xlu0 %769
          %v771 = vrcp.pop %v770
          %v772 = vmul.f32 %v767, %v771
          %v773 = vpack.c.bf16 %v772, %v772
          %774 = vrot.lane.b32.xlu0 %v476, 48
          %v775 = vpop.permute.xlu0 %774
          %v777 = vsel %vm486, %v773, 0
          %v780 = vsel %vm552, %v775, 0
          %782 = vmatprep.subr.bf16.mxu0 0
          %783 = vmatpush1.bf16.msra.mxu0 0
          %784 = vmatprep.subr.bf16.mxu0 0
          %785 = vmatpush1.bf16.msra.mxu0 0
          %786 = vmatprep.subr.bf16.mxu0 0
          %787 = vmatpush1.bf16.msra.mxu0 0
          %788 = vmatprep.subr.bf16.mxu0 0
          %789 = vmatpush1.bf16.msra.mxu0 0
          %790 = vmatprep.subr.bf16.mxu0 0
          %791 = vmatpush1.bf16.msra.mxu0 0
          %792 = vmatprep.subr.bf16.mxu0 0
          %793 = vmatpush1.bf16.msra.mxu0 0
          %794 = vmatprep.subr.bf16.mxu0 0
          %795 = vmatpush1.bf16.msra.mxu0 0
          %796 = vmatprep.subr.bf16.mxu0 0
          %797 = vmatpush1.bf16.msra.mxu0 %v780
          %798 = vmatprep.subr.bf16.mxu0 0
          %799 = vmatpush2.bf16.msra.mxu0 0
          %800 = vmatprep.subr.bf16.mxu0 0
          %801 = vmatpush2.bf16.msra.mxu0 0
          %802 = vmatprep.subr.bf16.mxu0 0
          %803 = vmatpush2.bf16.msra.mxu0 0
          %804 = vmatprep.subr.bf16.mxu0 0
          %805 = vmatpush2.bf16.msra.mxu0 0
          %806 = vmatprep.subr.bf16.mxu0 0
          %807 = vmatpush2.bf16.msra.mxu0 0
          %808 = vmatprep.subr.bf16.mxu0 0
          %809 = vmatpush2.bf16.msra.mxu0 0
          %810 = vmatprep.subr.bf16.mxu0 0
          %811 = vmatpush2.bf16.msra.mxu0 0
          %812 = vmatprep.subr.bf16.mxu0 0
          %813 = vmatpush2.bf16.msra.mxu0 0
          %814 = vmatprep.mubr.bf16.mxu0 0
          %815 = vmatmul.mubr.bf16.gmra.mxu0 %v777
          %v816 = vpop.f32.mrf.mxu0
          %v817 = vadd.f32 0.0, %v816
          %v818 = vpop.f32.mrf.mxu0
          %v819 = vpop.f32.mrf.mxu0
          %v820 = vpop.f32.mrf.mxu0
          %821 = vdwg.mxu0
          %v822 = vpack.c.bf16 %v817, %v817
          %823 = vrot.lane.b32.xlu0 %v476, 104
          %v824 = vpop.permute.xlu0 %823
          %825 = vrot.lane.b32.xlu0 %v476, 72
          %v826 = vpop.permute.xlu0 %825
          %v828 = vsel %vm486, %v824, 0
          %v831 = vsel %vm486, %v826, 0
          %833 = vmatprep.subr.bf16.mxu0 0
          %834 = vmatpush1.bf16.xpose.msra.mxu0 0
          %835 = vmatprep.subr.bf16.mxu0 0
          %836 = vmatpush1.bf16.xpose.msra.mxu0 0
          %837 = vmatprep.subr.bf16.mxu0 0
          %838 = vmatpush1.bf16.xpose.msra.mxu0 0
          %839 = vmatprep.subr.bf16.mxu0 0
          %840 = vmatpush1.bf16.xpose.msra.mxu0 0
          %841 = vmatprep.subr.bf16.mxu0 0
          %842 = vmatpush1.bf16.xpose.msra.mxu0 0
          %843 = vmatprep.subr.bf16.mxu0 0
          %844 = vmatpush1.bf16.xpose.msra.mxu0 0
          %845 = vmatprep.subr.bf16.mxu0 0
          %846 = vmatpush1.bf16.xpose.msra.mxu0 0
          %847 = vmatprep.subr.bf16.mxu0 0
          %848 = vmatpush1.bf16.xpose.msra.mxu0 %v831
          %849 = vmatprep.subr.bf16.mxu0 0
          %850 = vmatpush2.bf16.xpose.msra.mxu0 0
          %851 = vmatprep.subr.bf16.mxu0 0
          %852 = vmatpush2.bf16.xpose.msra.mxu0 0
          %853 = vmatprep.subr.bf16.mxu0 0
          %854 = vmatpush2.bf16.xpose.msra.mxu0 0
          %855 = vmatprep.subr.bf16.mxu0 0
          %856 = vmatpush2.bf16.xpose.msra.mxu0 0
          %857 = vmatprep.subr.bf16.mxu0 0
          %858 = vmatpush2.bf16.xpose.msra.mxu0 0
          %859 = vmatprep.subr.bf16.mxu0 0
          %860 = vmatpush2.bf16.xpose.msra.mxu0 0
          %861 = vmatprep.subr.bf16.mxu0 0
          %862 = vmatpush2.bf16.xpose.msra.mxu0 0
          %863 = vmatprep.subr.bf16.mxu0 0
          %864 = vmatpush2.bf16.xpose.msra.mxu0 0
          %865 = vmatprep.mubr.bf16.mxu0 0
          %866 = vmatmul.mubr.bf16.gmra.mxu0 %v828
          %v867 = vpop.f32.mrf.mxu0
          %v868 = vadd.f32 0.0, %v867
          %v869 = vpop.f32.mrf.mxu0
          %v870 = vpop.f32.mrf.mxu0
          %v871 = vpop.f32.mrf.mxu0
          %872 = vdwg.mxu0
          %v873 = vmul.f32 %v868, 0.35355338
          %v874 = vadd.f32 %v873, %v482
          %v875 = vsel %vm486, %v874, -inf
          %876 = vmax.xlane.f32.xlu0 %v875
          %v877 = vpop.xlane.xlu0 %876
          %v878 = vsub.f32 %v874, %v877
          %v879 = vmul.f32 %v878, 1.442695
          %v880 = vpow.pop %v879
          %v881 = vsel %vm486, %v880, 0.0
          %882 = vadd.xlane.f32.xlu0 %v881
          %v883 = vpop.xlane.xlu0 %882
          %v884 = vrcp.pop %v883
          %v885 = vmul.f32 %v880, %v884
          %v886 = vpack.c.bf16 %v885, %v885
          %887 = vrot.lane.b32.xlu0 %v476, 40
          %v888 = vpop.permute.xlu0 %887
          %v890 = vsel %vm486, %v886, 0
          %v893 = vsel %vm552, %v888, 0
          %895 = vmatprep.subr.bf16.mxu0 0
          %896 = vmatpush1.bf16.msra.mxu0 0
          %897 = vmatprep.subr.bf16.mxu0 0
          %898 = vmatpush1.bf16.msra.mxu0 0
          %899 = vmatprep.subr.bf16.mxu0 0
          %900 = vmatpush1.bf16.msra.mxu0 0
          %901 = vmatprep.subr.bf16.mxu0 0
          %902 = vmatpush1.bf16.msra.mxu0 0
          %903 = vmatprep.subr.bf16.mxu0 0
          %904 = vmatpush1.bf16.msra.mxu0 0
          %905 = vmatprep.subr.bf16.mxu0 0
          %906 = vmatpush1.bf16.msra.mxu0 0
          %907 = vmatprep.subr.bf16.mxu0 0
          %908 = vmatpush1.bf16.msra.mxu0 0
          %909 = vmatprep.subr.bf16.mxu0 0
          %910 = vmatpush1.bf16.msra.mxu0 %v893
          %911 = vmatprep.subr.bf16.mxu0 0
          %912 = vmatpush2.bf16.msra.mxu0 0
          %913 = vmatprep.subr.bf16.mxu0 0
          %914 = vmatpush2.bf16.msra.mxu0 0
          %915 = vmatprep.subr.bf16.mxu0 0
          %916 = vmatpush2.bf16.msra.mxu0 0
          %917 = vmatprep.subr.bf16.mxu0 0
          %918 = vmatpush2.bf16.msra.mxu0 0
          %919 = vmatprep.subr.bf16.mxu0 0
          %920 = vmatpush2.bf16.msra.mxu0 0
          %921 = vmatprep.subr.bf16.mxu0 0
          %922 = vmatpush2.bf16.msra.mxu0 0
          %923 = vmatprep.subr.bf16.mxu0 0
          %924 = vmatpush2.bf16.msra.mxu0 0
          %925 = vmatprep.subr.bf16.mxu0 0
          %926 = vmatpush2.bf16.msra.mxu0 0
          %927 = vmatprep.mubr.bf16.mxu0 0
          %928 = vmatmul.mubr.bf16.gmra.mxu0 %v890
          %v929 = vpop.f32.mrf.mxu0
          %v930 = vadd.f32 0.0, %v929
          %v931 = vpop.f32.mrf.mxu0
          %v932 = vpop.f32.mrf.mxu0
          %v933 = vpop.f32.mrf.mxu0
          %934 = vdwg.mxu0
          %v935 = vpack.c.bf16 %v930, %v930
          %937 = vrot.lane.b32.xlu0 %v709, 8
          %v938 = vpop.permute.xlu0 %937
          %940 = vrot.lane.b32.xlu0 %v822, 16
          %v941 = vpop.permute.xlu0 %940
          %943 = vrot.lane.b32.xlu0 %v935, 24
          %v944 = vpop.permute.xlu0 %943
          %v947 = vsel %vm486, %v596, %v938
          %vm948 = vcmask 130048
          %v950 = vsel %vm948, %v947, %v941
          %vm951 = vcmask 195584
          %v953 = vsel %vm951, %v950, %v944
          %v954 = vld [vmem:[%s4] sm:$0xf]
          %v955 = vld [vmem:[%s4 + $0x4] sm:$0xf]
          %v956 = vld [vmem:[%s4 + $0x8] sm:$0xf]
          %v957 = vld [vmem:[%s4 + $0xc] sm:$0xf]
          %v962 = vunpack.c.l.b16 %v954
          %v963 = vunpack.c.l.b16 %v955
          %v964 = vunpack.c.l.b16 %v956
          %v965 = vunpack.c.l.b16 %v957
          %v966 = vpack.c.b16 %v963, %v962
          %v967 = vpack.c.b16 %v965, %v964
          %v970 = vsel %vm387, %v953, 0
          %972 = vmatprep.subr.bf16.mxu0 0
          %973 = vmatpush1.bf16.msra.mxu0 0
          %974 = vmatprep.subr.bf16.mxu0 0
          %975 = vmatpush1.bf16.msra.mxu0 0
          %976 = vmatprep.subr.bf16.mxu0 0
          %977 = vmatpush1.bf16.msra.mxu0 0
          %978 = vmatprep.subr.bf16.mxu0 0
          %979 = vmatpush1.bf16.msra.mxu0 0
          %980 = vmatprep.subr.bf16.mxu0 0
          %981 = vmatpush1.bf16.msra.mxu0 0
          %982 = vmatprep.subr.bf16.mxu0 0
          %983 = vmatpush1.bf16.msra.mxu0 0
          %984 = vmatprep.subr.bf16.mxu0 0
          %985 = vmatpush1.bf16.msra.mxu0 %v967
          %986 = vmatprep.subr.bf16.mxu0 0
          %987 = vmatpush1.bf16.msra.mxu0 %v966
          %988 = vmatprep.subr.bf16.mxu0 0
          %989 = vmatpush2.bf16.msra.mxu0 0
          %990 = vmatprep.subr.bf16.mxu0 0
          %991 = vmatpush2.bf16.msra.mxu0 0
          %992 = vmatprep.subr.bf16.mxu0 0
          %993 = vmatpush2.bf16.msra.mxu0 0
          %994 = vmatprep.subr.bf16.mxu0 0
          %995 = vmatpush2.bf16.msra.mxu0 0
          %996 = vmatprep.subr.bf16.mxu0 0
          %997 = vmatpush2.bf16.msra.mxu0 0
          %998 = vmatprep.subr.bf16.mxu0 0
          %999 = vmatpush2.bf16.msra.mxu0 0
          %1000 = vmatprep.subr.bf16.mxu0 0
          %1001 = vmatpush2.bf16.msra.mxu0 0
          %1002 = vmatprep.subr.bf16.mxu0 0
          %1003 = vmatpush2.bf16.msra.mxu0 0
          %1004 = vmatprep.mubr.bf16.mxu0 0
          %1005 = vmatmul.mubr.bf16.gmra.mxu0 %v970
          %v1006 = vpop.f32.mrf.mxu0
          %v1007 = vadd.f32 0.0, %v1006
          %v1008 = vpop.f32.mrf.mxu0
          %v1009 = vpop.f32.mrf.mxu0
          %v1010 = vpop.f32.mrf.mxu0
          %1011 = vdwg.mxu0
          %v1012 = vadd.f32 %v384, %v1007
          %1013 = vst.msk [vmem:[%s364] sm:$0xff] %vm387, %v1012
          %v1014 = vld [vmem:[%s5] sm:$0x1]
          %v1015 = vld [vmem:[%s6] sm:$0x1]
          %v1016 = vsel %vm387, %v1012, 0.0
          %1017 = vadd.xlane.f32.xlu0 %v1016
          %v1018 = vpop.xlane.xlu0 %1017
          %v1019 = vmul.f32 %v1018, %v391
          %v1020 = vsub.f32 %v1012, %v1019
          %v1021 = vmul.f32 %v1020, %v1020
          %v1022 = vsel %vm387, %v1021, 0.0
          %1023 = vadd.xlane.f32.xlu0 %v1022
          %v1024 = vpop.xlane.xlu0 %1023
          %v1025 = vmul.f32 %v1024, %v391
          %v1026 = vadd.f32 %v1025, 1e-05
          %v1027 = vrsqrt.pop %v1026
          %v1028 = vmul.f32 %v1020, %v1027
          %v1030 = vlaneseq
          %v1031 = vshrl.u32 %v1030, 7
          %v1032 = vsub.s32 0, %v1031
          %v1033 = vrot.slane %v1014, %v1032
          %v1035 = vmul.f32 %v1028, %v1033
          %v1037 = vlaneseq
          %v1038 = vshrl.u32 %v1037, 7
          %v1039 = vsub.s32 0, %v1038
          %v1040 = vrot.slane %v1015, %v1039
          %v1042 = vadd.f32 %v1035, %v1040
          %v1043 = vpack.c.bf16 %v1042, %v1042
          %vm1044 = vcmask 257024
          %1045 = vst.msk [vmem:[#allocation2] sm:$0xf] %vm1044, %v1043
        $region60: #{tpu_custom_call.1} parent=55 // pred_fallthru
          _
        %v1046 = vld [vmem:[#allocation2] sm:$0xf]
        %v1047 = vld [vmem:[%s372] sm:$0xf]
        %v1048 = vld [vmem:[%s372 + $0x4] sm:$0xf]
        %v1049 = vld [vmem:[%s372 + $0x8] sm:$0xf]
        %v1050 = vld [vmem:[%s372 + $0xc] sm:$0xf]
        %v1055 = vunpack.c.l.b16 %v1047
        %v1056 = vunpack.c.l.b16 %v1048
        %v1057 = vunpack.c.l.b16 %v1049
        %v1058 = vunpack.c.l.b16 %v1050
        %v1059 = vpack.c.b16 %v1056, %v1055
        %v1060 = vpack.c.b16 %v1058, %v1057
        %vm1063 = vcmask 261120
        %v1065 = vsel %vm1063, %v1046, 0
        %1067 = vmatprep.subr.bf16.mxu0 0
        %1068 = vmatpush1.bf16.msra.mxu0 0
        %1069 = vmatprep.subr.bf16.mxu0 0
        %1070 = vmatpush1.bf16.msra.mxu0 0
        %1071 = vmatprep.subr.bf16.mxu0 0
        %1072 = vmatpush1.bf16.msra.mxu0 0
        %1073 = vmatprep.subr.bf16.mxu0 0
        %1074 = vmatpush1.bf16.msra.mxu0 0
        %1075 = vmatprep.subr.bf16.mxu0 0
        %1076 = vmatpush1.bf16.msra.mxu0 0
        %1077 = vmatprep.subr.bf16.mxu0 0
        %1078 = vmatpush1.bf16.msra.mxu0 0
        %1079 = vmatprep.subr.bf16.mxu0 0
        %1080 = vmatpush1.bf16.msra.mxu0 %v1060
        %1081 = vmatprep.subr.bf16.mxu0 0
        %1082 = vmatpush1.bf16.msra.mxu0 %v1059
        %1083 = vmatprep.subr.bf16.mxu0 0
        %1084 = vmatpush2.bf16.msra.mxu0 0
        %1085 = vmatprep.subr.bf16.mxu0 0
        %1086 = vmatpush2.bf16.msra.mxu0 0
        %1087 = vmatprep.subr.bf16.mxu0 0
        %1088 = vmatpush2.bf16.msra.mxu0 0
        %1089 = vmatprep.subr.bf16.mxu0 0
        %1090 = vmatpush2.bf16.msra.mxu0 0
        %1091 = vmatprep.subr.bf16.mxu0 0
        %1092 = vmatpush2.bf16.msra.mxu0 0
        %1093 = vmatprep.subr.bf16.mxu0 0
        %1094 = vmatpush2.bf16.msra.mxu0 0
        %1095 = vmatprep.subr.bf16.mxu0 0
        %1096 = vmatpush2.bf16.msra.mxu0 0
        %1097 = vmatprep.subr.bf16.mxu0 0
        %1098 = vmatpush2.bf16.msra.mxu0 0
        %1099 = vmatprep.mubr.bf16.mxu0 0
        %1100 = vmatmul.mubr.bf16.gmra.mxu0 %v1065
        %v1101 = vpop.f32.mrf.mxu0
        %v1102 = vadd.f32 0.0, %v1101
        %v1103 = vpop.f32.mrf.mxu0
        %v1104 = vpop.f32.mrf.mxu0
        %v1105 = vpop.f32.mrf.mxu0
        %1106 = vdwg.mxu0
        %v1107 = vmul.f32 %v1102, 0.5
        %v1108 = vrcp.pop 1.4142135
        %v1109 = vmul.f32 %v1102, %v1108
        %v1110 = verf.f32.pop %v1109
        %v1111 = vadd.f32 %v1110, 1.0
        %v1112 = vmul.f32 %v1107, %v1111
        %v1113 = vpack.c.bf16 %v1112, %v1112
        %v1114 = vld [vmem:[%s377] sm:$0xf]
        %v1115 = vld [vmem:[%s377 + $0x4] sm:$0xf]
        %v1116 = vld [vmem:[%s377 + $0x8] sm:$0xf]
        %v1117 = vld [vmem:[%s377 + $0xc] sm:$0xf]
        %v1118 = vld [vmem:[%s377 + $0x10] sm:$0xf]
        %v1119 = vld [vmem:[%s377 + $0x14] sm:$0xf]
        %v1120 = vld [vmem:[%s377 + $0x18] sm:$0xf]
        %v1121 = vld [vmem:[%s377 + $0x1c] sm:$0xf]
        %v1122 = vld [vmem:[%s377 + $0x20] sm:$0xf]
        %v1123 = vld [vmem:[%s377 + $0x24] sm:$0xf]
        %v1124 = vld [vmem:[%s377 + $0x28] sm:$0xf]
        %v1125 = vld [vmem:[%s377 + $0x2c] sm:$0xf]
        %v1126 = vld [vmem:[%s377 + $0x30] sm:$0xf]
        %v1127 = vld [vmem:[%s377 + $0x34] sm:$0xf]
        %v1128 = vld [vmem:[%s377 + $0x38] sm:$0xf]
        %v1129 = vld [vmem:[%s377 + $0x3c] sm:$0xf]
        %v1146 = vunpack.c.l.b16 %v1114
        %v1147 = vunpack.c.l.b16 %v1115
        %v1148 = vunpack.c.l.b16 %v1116
        %v1149 = vunpack.c.l.b16 %v1117
        %v1150 = vunpack.c.l.b16 %v1118
        %v1151 = vunpack.c.l.b16 %v1119
        %v1152 = vunpack.c.l.b16 %v1120
        %v1153 = vunpack.c.l.b16 %v1121
        %v1154 = vunpack.c.l.b16 %v1122
        %v1155 = vunpack.c.l.b16 %v1123
        %v1156 = vunpack.c.l.b16 %v1124
        %v1157 = vunpack.c.l.b16 %v1125
        %v1158 = vunpack.c.l.b16 %v1126
        %v1159 = vunpack.c.l.b16 %v1127
        %v1160 = vunpack.c.l.b16 %v1128
        %v1161 = vunpack.c.l.b16 %v1129
        %v1162 = vpack.c.b16 %v1147, %v1146
        %v1163 = vpack.c.b16 %v1149, %v1148
        %v1164 = vpack.c.b16 %v1151, %v1150
        %v1165 = vpack.c.b16 %v1153, %v1152
        %v1166 = vpack.c.b16 %v1155, %v1154
        %v1167 = vpack.c.b16 %v1157, %v1156
        %v1168 = vpack.c.b16 %v1159, %v1158
        %v1169 = vpack.c.b16 %v1161, %v1160
        %1178 = vmatprep.subr.bf16.mxu0 0
        %1179 = vmatpush1.bf16.msra.mxu0 %v1169
        %1180 = vmatprep.subr.bf16.mxu0 0
        %1181 = vmatpush1.bf16.msra.mxu0 %v1168
        %1182 = vmatprep.subr.bf16.mxu0 0
        %1183 = vmatpush1.bf16.msra.mxu0 %v1167
        %1184 = vmatprep.subr.bf16.mxu0 0
        %1185 = vmatpush1.bf16.msra.mxu0 %v1166
        %1186 = vmatprep.subr.bf16.mxu0 0
        %1187 = vmatpush1.bf16.msra.mxu0 %v1165
        %1188 = vmatprep.subr.bf16.mxu0 0
        %1189 = vmatpush1.bf16.msra.mxu0 %v1164
        %1190 = vmatprep.subr.bf16.mxu0 0
        %1191 = vmatpush1.bf16.msra.mxu0 %v1163
        %1192 = vmatprep.subr.bf16.mxu0 0
        %1193 = vmatpush1.bf16.msra.mxu0 %v1162
        %1194 = vmatprep.subr.bf16.mxu0 0
        %1195 = vmatpush2.bf16.msra.mxu0 0
        %1196 = vmatprep.subr.bf16.mxu0 0
        %1197 = vmatpush2.bf16.msra.mxu0 0
        %1198 = vmatprep.subr.bf16.mxu0 0
        %1199 = vmatpush2.bf16.msra.mxu0 0
        %1200 = vmatprep.subr.bf16.mxu0 0
        %1201 = vmatpush2.bf16.msra.mxu0 0
        %1202 = vmatprep.subr.bf16.mxu0 0
        %1203 = vmatpush2.bf16.msra.mxu0 0
        %1204 = vmatprep.subr.bf16.mxu0 0
        %1205 = vmatpush2.bf16.msra.mxu0 0
        %1206 = vmatprep.subr.bf16.mxu0 0
        %1207 = vmatpush2.bf16.msra.mxu0 0
        %1208 = vmatprep.subr.bf16.mxu0 0
        %1209 = vmatpush2.bf16.msra.mxu0 0
        %1210 = vmatprep.mubr.bf16.mxu0 0
        %1211 = vmatmul.mubr.bf16.gmra.mxu0 %v1113
        %v1212 = vpop.f32.mrf.mxu0
        %v1213 = vadd.f32 0.0, %v1212
        %v1214 = vpop.f32.mrf.mxu0
        %v1215 = vpop.f32.mrf.mxu0
        %v1216 = vpop.f32.mrf.mxu0
        %1217 = vdwg.mxu0
        %v1218 = vld [vmem:[%s364] sm:$0xff]
        %v1219 = vadd.f32 %v1218, %v1213
        %1220 = vst.msk [vmem:[%s364] sm:$0xff] %vm1063, %v1219
        %s1221 = sand.u32 %s247, 1
        %s1222 = scalar_lea.sflag [#allocation4], %s1221
        %s1223 = sand.u32 %s247, 1
        %s1224 = smul.addr %s1223, 8
        %s1225 = scalar_lea.vmem [#allocation3], %s1224
        // Predicated region
        $region61: #{tpu_custom_call.1} parent=55 // pred_check
          %p1226 = pneg %p257
        $region62: #{tpu_custom_call.1} parent=55 // pred_check_branch
          %1228 = sbr.rel (%p1226) target = $region64
        $region63: #{tpu_custom_call.1} parent=55 // pred_region
          %s1230 = ssub.s32 128, 128
          %1231 = vsyncadd %s1222, %s1230
          %s1232 = smul.addr %s27, 128
          %s1233 = scalar_lea.hbm %s9, %s1232
          %s1235 = sshll.u32 %s1225, 4
          %s1236 = int_to_ptr.vmem [resolvable:$true] %s1235
          %1238 = dma.vmem_to_hbm [thread:$0]  %s1236, 128, %s1233, %s1222
        $region64: #{tpu_custom_call.1} parent=55 // pred_fallthru
          _
      $region56: #{tpu_custom_call.1} parent=5 // pred_fallthru
        _
      %p1239 = scmp.le.s32.totalorder 2, %s18
      // Predicated region
      $region65: #{tpu_custom_call.1} parent=5 // pred_check
        %p1240 = pneg %p1239
      $region66: #{tpu_custom_call.1} parent=5 // pred_check_branch
        %1242 = sbr.rel (%p1240) target = $region68
      $region67: #{tpu_custom_call.1} parent=5 // pred_region
        %s1243 = ssub.s32 %s18, 2
        // Predicated region
        $region69: #{tpu_custom_call.1} parent=67 // pred_check
          %p1244 = pneg %p263
        $region70: #{tpu_custom_call.1} parent=67 // pred_check_branch
          %1246 = sbr.rel (%p1244) target = $region72
        $region71: #{tpu_custom_call.1} parent=67 // pred_region
          %s1247 = sand.u32 %s248, 1
          %s1248 = scalar_lea.sflag [#allocation4], %s1247
          %s1249 = sand.u32 %s248, 1
          %s1250 = smul.addr %s1249, 8
          %s1251 = scalar_lea.vmem [#allocation3], %s1250
          %1252 = dma.done %s1248, 128
        $region72: #{tpu_custom_call.1} parent=67 // pred_fallthru
          _
      $region68: #{tpu_custom_call.1} parent=5 // pred_fallthru
        _
    $region6: #{tpu_custom_call.1} parent=1 // loop_footer
      %s22 = sadd.s32 1, %s18
    $region7: #{tpu_custom_call.1} parent=1 // loop_footer_branch
      %17 = sbr.rel target = $region3
    $region8: #{tpu_custom_call.1} parent=1 // loop_exit
      _
    %1253 = vsyncpa [#allocation4], 1
    %s1254 = scalar_lea.sflag [#allocation4], 1
    %1255 = vsyncpa %s1254, 1

</llo_original>
